<compile_context>
chip_gen: v7x
topology: tpu7x:2x2x1
jax: 0.10.0
libtpu: 0.0.40
codegen_flags: <defaults>
</compile_context>

<pallas_src>
import jax
import jax.numpy as jnp
from jax.experimental import pallas as pl
from jax.experimental.pallas import tpu as pltpu


_VMEM = pl.BlockSpec(memory_space=pltpu.MemorySpace.VMEM)
_MXU_DTYPE = jnp.bfloat16   # MXU-operand dtype only; state & elementwise stay f32


# ---------------------------------------------------------------------------
# Fused kernel: embedding (one-hot matmul) + staggered 2-layer LSTM + Linear
# ---------------------------------------------------------------------------
def fused_lstm_lm_kernel(ids_ref, h0_ref, c0_ref,
                         emb_ref, rhs_ref, b0_ref, b1_ref,
                         lw_ref, lb_ref,
                         out_ref, hn_ref, cn_ref,
                         x_ref, seq_ref):
    """All shapes static.  PyTorch gate order (i, f, g, o).

    ids:   (T*B, 1)  int32 token ids, time-major flattened (row = t*B + b)
    h0,c0: (2*B, H)  initial state, layer-major (rows [0,B)=layer0, [B,2B)=layer1)
    emb:   (V, E)    embedding table (f32; one-hot matmul keeps the gather exact)
    rhs:   (E+H, 8H) bf16 stacked weights [[Wih0^T | Wih1^T], [Whh0^T | Whh1^T]]
    b0,b1: (1, 4H)   per-layer pre-summed biases (b_ih + b_hh)
    lw:    (H, V)    bf16 final linear weight, transposed
    lb:    (1, V)    final linear bias
    out:   (T*B, V)  logits (lane-dense, V multiple of 128)
    hn,cn: (2*B, H)  final hidden/cell state
    x_ref:   (T*B, E) VMEM scratch — embedded inputs
    seq_ref: (T*B, H) VMEM scratch — layer-1 output slab
    """
    TB, E = x_ref.shape
    V = emb_ref.shape[0]
    twoB, H = hn_ref.shape
    B = twoB // 2
    T = TB // B
    H4 = 4 * H
    f32 = jnp.float32

    # ---- Fused embedding lookup: one-hot @ table (exact; V == 128 lanes). ----
    onehot = (ids_ref[...] ==
              jax.lax.broadcasted_iota(jnp.int32, (TB, V), 1)).astype(f32)
    x_ref[...] = jnp.dot(onehot, emb_ref[...], preferred_element_type=f32)

    # ---- Hoisted loop constants. ----
    rhs = rhs_ref[...]                                                # (E+H, 8H)
    top_g = jax.lax.broadcasted_iota(jnp.int32, (twoB, H4), 0) < B    # (2B, 4H)
    top_s = jax.lax.broadcasted_iota(jnp.int32, (twoB, H), 0) < B     # (2B, H)
    bias = jnp.where(top_g, b0_ref[...], b1_ref[...])                 # (2B, 4H)

    h_st = h0_ref[...]      # (2B, H) stacked state: layer-0 rows / layer-1 rows
    c_st = c0_ref[...]

    # Staggered recurrence: combined step s runs layer-0 @ t=s (s < T) and
    # layer-1 @ t=s-1 (s >= 1).  Layer-1's input is layer-0's *current* h.
    # Statically unrolled (T is small); use lax.fori_loop if T grows past ~32.
    for s in range(T + 1):
        h_top = h_st[0:B, :]                         # layer-0 h (= layer-1 input)
        if s < T:
            x_s = x_ref[s * B:(s + 1) * B, :]        # (B, E) ref load, no value relayout
        else:
            x_s = jnp.zeros((B, E), f32)             # top rows are discarded below

        inp = jnp.concatenate([x_s, h_top], axis=0)  # (2B, E)
        lhs = jnp.concatenate([inp, h_st], axis=1)   # (2B, E+H) — full 8 sublanes

        # One stacked MXU matmul for BOTH layers; bf16 operands, f32 accumulate.
        gf = jnp.dot(lhs.astype(_MXU_DTYPE), rhs,
                     preferred_element_type=f32)                         # (2B, 8H)
        gates = jnp.where(top_g, gf[:, 0:H4], gf[:, H4:2 * H4]) + bias   # (2B, 4H)

        # Full-tile activations (2 EUP ops); gate blocks extracted once.
        sg = jax.nn.sigmoid(gates)
        th = jnp.tanh(gates)
        i_g = sg[:, 0 * H:1 * H]
        f_g = sg[:, 1 * H:2 * H]
        g_g = th[:, 2 * H:3 * H]
        o_g = sg[:, 3 * H:4 * H]

        c_new = f_g * c_st + i_g * g_g               # both layers updated at once
        h_new = o_g * jnp.tanh(c_new)

        if s == 0:                      # layer-1 idle this step: keep its rows
            h_st = jnp.where(top_s, h_new, h_st)
            c_st = jnp.where(top_s, c_new, c_st)
        elif s == T:                    # layer-0 idle this step: keep its rows
            h_st = jnp.where(top_s, h_st, h_new)
            c_st = jnp.where(top_s, c_st, c_new)
        else:
            h_st = h_new
            c_st = c_new

        if s >= 1:                      # layer-1 just produced output for t = s-1
            seq_ref[(s - 1) * B:s * B, :] = h_st[B:2 * B, :]

    hn_ref[...] = h_st
    cn_ref[...] = c_st

    # ---- Final linear over the whole layer-1 slab (lane-dense V). ----
    out_ref[...] = (jnp.dot(seq_ref[...].astype(_MXU_DTYPE), lw_ref[...],
                            preferred_element_type=f32) + lb_ref[...])


# ---------------------------------------------------------------------------
# Parameters
# ---------------------------------------------------------------------------
def init_params(key, vocab_size, emb_dim, hidden_dim):
    """PyTorch-style initialization (nn.Embedding / nn.LSTM / nn.Linear)."""
    ks = jax.random.split(key, 11)
    bound = 1.0 / (hidden_dim ** 0.5)

    def u(k, shape):
        return jax.random.uniform(k, shape, jnp.float32, -bound, bound)

    return {
        "embedding": jax.random.normal(ks[0], (vocab_size, emb_dim), jnp.float32),
        "wih0": u(ks[1], (4 * hidden_dim, emb_dim)),
        "whh0": u(ks[2], (4 * hidden_dim, hidden_dim)),
        "bih0": u(ks[3], (4 * hidden_dim,)),
        "bhh0": u(ks[4], (4 * hidden_dim,)),
        "wih1": u(ks[5], (4 * hidden_dim, hidden_dim)),
        "whh1": u(ks[6], (4 * hidden_dim, hidden_dim)),
        "bih1": u(ks[7], (4 * hidden_dim,)),
        "bhh1": u(ks[8], (4 * hidden_dim,)),
        "lin_w": u(ks[9], (vocab_size, hidden_dim)),
        "lin_b": u(ks[10], (vocab_size,)),
    }


def prepare_kernel_params(p):
    """One-time prep: stack/transpose weights, pre-sum biases, cast MXU operands."""
    emb_dim = p["wih0"].shape[1]
    hidden_dim = p["whh0"].shape[1]
    # The stacked lhs shares its input-column block between layers, so E == H
    # is required here; for E != H pad the narrower block (and weight rows)
    # with zeros.
    assert emb_dim == hidden_dim, "stacked-GEMM layout assumes emb_dim == hidden_dim"
    rhs = jnp.concatenate([
        jnp.concatenate([p["wih0"].T, p["wih1"].T], axis=1),   # (E, 8H)
        jnp.concatenate([p["whh0"].T, p["whh1"].T], axis=1),   # (H, 8H)
    ], axis=0)
    return {
        "emb": p["embedding"],
        "rhs": rhs.astype(_MXU_DTYPE),
        "b0": (p["bih0"] + p["bhh0"])[None, :],
        "b1": (p["bih1"] + p["bhh1"])[None, :],
        "lw_t": p["lin_w"].T.astype(_MXU_DTYPE),
        "lb": p["lin_b"][None, :],
    }


# ---------------------------------------------------------------------------
# Forward pass (matches TrainingModel.forward)
# ---------------------------------------------------------------------------
def forward(kparams, input_ids, hidden=None):
    """input_ids: (seq_len, batch) int32.

    Returns (output, (h_n, c_n)):
      output: (seq_len*batch, vocab_size)
      h_n, c_n: (2, batch, hidden_dim)
    """
    T, B = input_ids.shape
    H = kparams["b0"].shape[1] // 4
    E = kparams["emb"].shape[1]
    V = kparams["lb"].shape[1]

    if hidden is None:
        h_0 = jnp.zeros((2, B, H), jnp.float32)
        c_0 = jnp.zeros((2, B, H), jnp.float32)
    else:
        h_0, c_0 = hidden

    ids = input_ids.reshape(T * B, 1).astype(jnp.int32)   # row = t*B + b

    out, hn, cn = pl.pallas_call(
        fused_lstm_lm_kernel,
        out_shape=(jax.ShapeDtypeStruct((T * B, V), jnp.float32),
                   jax.ShapeDtypeStruct((2 * B, H), jnp.float32),
                   jax.ShapeDtypeStruct((2 * B, H), jnp.float32)),
        in_specs=[_VMEM] * 9,
        out_specs=(_VMEM, _VMEM, _VMEM),
        scratch_shapes=[pltpu.VMEM((T * B, E), jnp.float32),   # embedded inputs
                        pltpu.VMEM((T * B, H), jnp.float32)],  # layer-1 outputs
    )(ids, h_0.reshape(2 * B, H), c_0.reshape(2 * B, H),
      kparams["emb"], kparams["rhs"], kparams["b0"], kparams["b1"],
      kparams["lw_t"], kparams["lb"])

    return out, (hn.reshape(2, B, H), cn.reshape(2, B, H))


# ---------------------------------------------------------------------------
# Pure-JAX reference (for correctness checking only; f32, HIGHEST precision)
# ---------------------------------------------------------------------------
def _reference_forward(params, input_ids, hidden=None):
    T, B = input_ids.shape
    H = params["whh0"].shape[1]
    if hidden is None:
        h_0 = jnp.zeros((2, B, H), jnp.float32)
        c_0 = jnp.zeros((2, B, H), jnp.float32)
    else:
        h_0, c_0 = hidden
    hp = jax.lax.Precision.HIGHEST
    x = jnp.take(params["embedding"], input_ids, axis=0)  # (T, B, E)
    layers = [(params["wih0"], params["whh0"], params["bih0"] + params["bhh0"]),
              (params["wih1"], params["whh1"], params["bih1"] + params["bhh1"])]
    h_n, c_n = [], []
    for layer, (wih, whh, b) in enumerate(layers):
        h, c = h_0[layer], c_0[layer]
        outs = []
        for t in range(T):
            gates = (jnp.dot(x[t], wih.T, precision=hp)
                     + jnp.dot(h, whh.T, precision=hp) + b[None, :])
            i_g = jax.nn.sigmoid(gates[:, 0 * H:1 * H])
            f_g = jax.nn.sigmoid(gates[:, 1 * H:2 * H])
            g_g = jnp.tanh(gates[:, 2 * H:3 * H])
            o_g = jax.nn.sigmoid(gates[:, 3 * H:4 * H])
            c = f_g * c + i_g * g_g
            h = o_g * jnp.tanh(c)
            outs.append(h)
        x = jnp.stack(outs, axis=0)
        h_n.append(h)
        c_n.append(c)
    out = (jnp.dot(x.reshape(T * B, H), params["lin_w"].T, precision=hp)
           + params["lin_b"][None, :])
    return out, (jnp.stack(h_n), jnp.stack(c_n))


if __name__ == "__main__":
    VOCAB = 128       # lane-dense logits AND one-hot width (multiple of 128)
    EMB_DIM = 32
    HIDDEN_DIM = 32   # 4H = 128 -> gate tile is exactly one f32 vreg
    SEQ_LEN = 8
    BATCH = 4         # 2B = 8  -> stacked state / gate tiles fill all 8 sublanes

    key = jax.random.PRNGKey(0)
    k_param, k_ids = jax.random.split(key)

    params = init_params(k_param, VOCAB, EMB_DIM, HIDDEN_DIM)
    kparams = prepare_kernel_params(params)
    input_ids = jax.random.randint(k_ids, (SEQ_LEN, BATCH), 0, VOCAB,
                                   dtype=jnp.int32)

    fwd = jax.jit(forward)
    output, (h_n, c_n) = fwd(kparams, input_ids)
    jax.block_until_ready((output, h_n, c_n))

    assert output.shape == (SEQ_LEN * BATCH, VOCAB)
    assert h_n.shape == (2, BATCH, HIDDEN_DIM)
    assert c_n.shape == (2, BATCH, HIDDEN_DIM)
    assert bool(jnp.all(jnp.isfinite(output)))

    # Correctness vs pure-JAX f32 reference (kernel uses bf16 MXU operands).
    ref_out, (ref_h, ref_c) = jax.jit(_reference_forward)(params, input_ids)
    err = max(float(jnp.max(jnp.abs(output - ref_out))),
              float(jnp.max(jnp.abs(h_n - ref_h))),
              float(jnp.max(jnp.abs(c_n - ref_c))))
    assert err < 5e-2, f"mismatch vs reference: max abs err = {err}"

    print("KERNEL_OK")
</pallas_src>

<mosaic_0001>
module attributes {stable_mosaic.version = 11 : i64} {
  func.func @fused_lstm_lm_kernel(%arg0: memref<32x1xi32, #tpu.memory_space<vmem>>, %arg1: memref<8x32xf32, #tpu.memory_space<vmem>>, %arg2: memref<8x32xf32, #tpu.memory_space<vmem>>, %arg3: memref<128x32xf32, #tpu.memory_space<vmem>>, %arg4: memref<64x256xbf16, #tpu.memory_space<vmem>>, %arg5: memref<1x128xf32, #tpu.memory_space<vmem>>, %arg6: memref<1x128xf32, #tpu.memory_space<vmem>>, %arg7: memref<32x128xbf16, #tpu.memory_space<vmem>>, %arg8: memref<1x128xf32, #tpu.memory_space<vmem>>, %arg9: memref<32x128xf32, #tpu.memory_space<vmem>>, %arg10: memref<8x32xf32, #tpu.memory_space<vmem>>, %arg11: memref<8x32xf32, #tpu.memory_space<vmem>>, %arg12: memref<32x32xf32, #tpu.memory_space<vmem>>, %arg13: memref<32x32xf32, #tpu.memory_space<vmem>>) attributes {dimension_semantics = [], scalar_prefetch = 0 : i64, scratch_operands = 2 : i64, tpu.core_type = #tpu.core_type<tc>} {
    %c0 = arith.constant 0 : index
    %c0_0 = arith.constant 0 : index
    %0 = vector.load %arg0[%c0, %c0_0] : memref<32x1xi32, #tpu.memory_space<vmem>>, vector<32x1xi32>
    %1 = tpu.iota {dimensions = array<i32: 1>} : vector<32x128xi32>
    %2 = vector.broadcast %0 : vector<32x1xi32> to vector<32x128xi32>
    %3 = arith.cmpi eq, %2, %1 : vector<32x128xi32>
    %4 = arith.extui %3 : vector<32x128xi1> to vector<32x128xi32>
    %5 = arith.sitofp %4 : vector<32x128xi32> to vector<32x128xf32>
    %c0_1 = arith.constant 0 : index
    %c0_2 = arith.constant 0 : index
    %6 = vector.load %arg3[%c0_1, %c0_2] : memref<128x32xf32, #tpu.memory_space<vmem>>, vector<128x32xf32>
    %cst = arith.constant dense<0.000000e+00> : vector<32x32xf32>
    %7 = tpu.matmul %5, %6, %cst {dimension_numbers = #tpu.dot_dimension_numbers<[1], [0], [0], [1], [0, 0, 1, 1], [], []>} : vector<32x128xf32>, vector<128x32xf32>, vector<32x32xf32> -> vector<32x32xf32>
    %c0_3 = arith.constant 0 : index
    %c0_4 = arith.constant 0 : index
    %8 = vector.load %arg12[%c0_3, %c0_4] : memref<32x32xf32, #tpu.memory_space<vmem>>, vector<32x32xf32>
    tpu.vector_store %arg12[%c0_3, %c0_4], %7 {strides = array<i32>} : memref<32x32xf32, #tpu.memory_space<vmem>>, vector<32x32xf32>,
    %c0_5 = arith.constant 0 : index
    %c0_6 = arith.constant 0 : index
    %9 = vector.load %arg4[%c0_5, %c0_6] : memref<64x256xbf16, #tpu.memory_space<vmem>>, vector<64x256xbf16>
    %10 = tpu.iota {dimensions = array<i32: 0>} : vector<8x128xi32>
    %c4_i32 = arith.constant 4 : i32
    %11 = vector.broadcast %c4_i32 : i32 to vector<8x128xi32>
    %12 = arith.cmpi slt, %10, %11 : vector<8x128xi32>
    %13 = tpu.iota {dimensions = array<i32: 0>} : vector<8x32xi32>
    %c4_i32_7 = arith.constant 4 : i32
    %14 = vector.broadcast %c4_i32_7 : i32 to vector<8x32xi32>
    %15 = arith.cmpi slt, %13, %14 : vector<8x32xi32>
    %c0_8 = arith.constant 0 : index
    %c0_9 = arith.constant 0 : index
    %16 = vector.load %arg5[%c0_8, %c0_9] : memref<1x128xf32, #tpu.memory_space<vmem>>, vector<1x128xf32>
    %c0_10 = arith.constant 0 : index
    %c0_11 = arith.constant 0 : index
    %17 = vector.load %arg6[%c0_10, %c0_11] : memref<1x128xf32, #tpu.memory_space<vmem>>, vector<1x128xf32>
    %18 = vector.shape_cast %16 : vector<1x128xf32> to vector<1x128xf32>
    %19 = vector.broadcast %18 : vector<1x128xf32> to vector<8x128xf32>
    %20 = vector.shape_cast %17 : vector<1x128xf32> to vector<1x128xf32>
    %21 = vector.broadcast %20 : vector<1x128xf32> to vector<8x128xf32>
    %22 = arith.select %12, %19, %21 : vector<8x128xi1>, vector<8x128xf32>
    %c0_12 = arith.constant 0 : index
    %c0_13 = arith.constant 0 : index
    %23 = vector.load %arg1[%c0_12, %c0_13] : memref<8x32xf32, #tpu.memory_space<vmem>>, vector<8x32xf32>
    %c0_14 = arith.constant 0 : index
    %c0_15 = arith.constant 0 : index
    %24 = vector.load %arg2[%c0_14, %c0_15] : memref<8x32xf32, #tpu.memory_space<vmem>>, vector<8x32xf32>
    %25 = vector.extract_strided_slice %23 {offsets = [0, 0], sizes = [4, 32], strides = [1, 1]} : vector<8x32xf32> to vector<4x32xf32>
    %c0_16 = arith.constant 0 : index
    %c0_17 = arith.constant 0 : index
    %26 = vector.load %arg12[%c0_16, %c0_17] : memref<32x32xf32, #tpu.memory_space<vmem>>, vector<4x32xf32>
    %27 = tpu.concatenate %26, %25 in 0 : vector<4x32xf32>, vector<4x32xf32> -> vector<8x32xf32>
    %28 = tpu.concatenate %27, %23 in 1 : vector<8x32xf32>, vector<8x32xf32> -> vector<8x64xf32>
    %29 = arith.truncf %28 : vector<8x64xf32> to vector<8x64xbf16>
    %cst_18 = arith.constant dense<0.000000e+00> : vector<8x256xf32>
    %30 = tpu.matmul %29, %9, %cst_18 {dimension_numbers = #tpu.dot_dimension_numbers<[1], [0], [0], [1], [0, 0, 1, 1], [], []>} : vector<8x64xbf16>, vector<64x256xbf16>, vector<8x256xf32> -> vector<8x256xf32>
    %31 = vector.extract_strided_slice %30 {offsets = [0, 0], sizes = [8, 128], strides = [1, 1]} : vector<8x256xf32> to vector<8x128xf32>
    %32 = vector.extract_strided_slice %30 {offsets = [0, 128], sizes = [8, 128], strides = [1, 1]} : vector<8x256xf32> to vector<8x128xf32>
    %33 = arith.select %12, %31, %32 : vector<8x128xi1>, vector<8x128xf32>
    %34 = arith.addf %33, %22 : vector<8x128xf32>
    %35 = arith.negf %34 : vector<8x128xf32>
    %36 = math.exp %35 : vector<8x128xf32>
    %cst_19 = arith.constant 1.000000e+00 : f32
    %37 = vector.broadcast %cst_19 : f32 to vector<8x128xf32>
    %38 = arith.addf %37, %36 : vector<8x128xf32>
    %39 = arith.divf %37, %38 : vector<8x128xf32>
    %40 = math.tanh %34 : vector<8x128xf32>
    %41 = vector.extract_strided_slice %39 {offsets = [0, 0], sizes = [8, 32], strides = [1, 1]} : vector<8x128xf32> to vector<8x32xf32>
    %42 = vector.extract_strided_slice %39 {offsets = [0, 32], sizes = [8, 32], strides = [1, 1]} : vector<8x128xf32> to vector<8x32xf32>
    %43 = vector.extract_strided_slice %40 {offsets = [0, 64], sizes = [8, 32], strides = [1, 1]} : vector<8x128xf32> to vector<8x32xf32>
    %44 = vector.extract_strided_slice %39 {offsets = [0, 96], sizes = [8, 32], strides = [1, 1]} : vector<8x128xf32> to vector<8x32xf32>
    %45 = arith.mulf %42, %24 : vector<8x32xf32>
    %46 = arith.mulf %41, %43 : vector<8x32xf32>
    %47 = arith.addf %45, %46 : vector<8x32xf32>
    %48 = math.tanh %47 : vector<8x32xf32>
    %49 = arith.mulf %44, %48 : vector<8x32xf32>
    %50 = arith.select %15, %49, %23 : vector<8x32xi1>, vector<8x32xf32>
    %51 = arith.select %15, %47, %24 : vector<8x32xi1>, vector<8x32xf32>
    %52 = vector.extract_strided_slice %50 {offsets = [0, 0], sizes = [4, 32], strides = [1, 1]} : vector<8x32xf32> to vector<4x32xf32>
    %c4 = arith.constant 4 : index
    %c0_20 = arith.constant 0 : index
    %53 = vector.load %arg12[%c4, %c0_20] : memref<32x32xf32, #tpu.memory_space<vmem>>, vector<4x32xf32>
    %54 = tpu.concatenate %53, %52 in 0 : vector<4x32xf32>, vector<4x32xf32> -> vector<8x32xf32>
    %55 = tpu.concatenate %54, %50 in 1 : vector<8x32xf32>, vector<8x32xf32> -> vector<8x64xf32>
    %56 = arith.truncf %55 : vector<8x64xf32> to vector<8x64xbf16>
    %cst_21 = arith.constant dense<0.000000e+00> : vector<8x256xf32>
    %57 = tpu.matmul %56, %9, %cst_21 {dimension_numbers = #tpu.dot_dimension_numbers<[1], [0], [0], [1], [0, 0, 1, 1], [], []>} : vector<8x64xbf16>, vector<64x256xbf16>, vector<8x256xf32> -> vector<8x256xf32>
    %58 = vector.extract_strided_slice %57 {offsets = [0, 0], sizes = [8, 128], strides = [1, 1]} : vector<8x256xf32> to vector<8x128xf32>
    %59 = vector.extract_strided_slice %57 {offsets = [0, 128], sizes = [8, 128], strides = [1, 1]} : vector<8x256xf32> to vector<8x128xf32>
    %60 = arith.select %12, %58, %59 : vector<8x128xi1>, vector<8x128xf32>
    %61 = arith.addf %60, %22 : vector<8x128xf32>
    %62 = arith.negf %61 : vector<8x128xf32>
    %63 = math.exp %62 : vector<8x128xf32>
    %cst_22 = arith.constant 1.000000e+00 : f32
    %64 = vector.broadcast %cst_22 : f32 to vector<8x128xf32>
    %65 = arith.addf %64, %63 : vector<8x128xf32>
    %66 = arith.divf %64, %65 : vector<8x128xf32>
    %67 = math.tanh %61 : vector<8x128xf32>
    %68 = vector.extract_strided_slice %66 {offsets = [0, 0], sizes = [8, 32], strides = [1, 1]} : vector<8x128xf32> to vector<8x32xf32>
    %69 = vector.extract_strided_slice %66 {offsets = [0, 32], sizes = [8, 32], strides = [1, 1]} : vector<8x128xf32> to vector<8x32xf32>
    %70 = vector.extract_strided_slice %67 {offsets = [0, 64], sizes = [8, 32], strides = [1, 1]} : vector<8x128xf32> to vector<8x32xf32>
    %71 = vector.extract_strided_slice %66 {offsets = [0, 96], sizes = [8, 32], strides = [1, 1]} : vector<8x128xf32> to vector<8x32xf32>
    %72 = arith.mulf %69, %51 : vector<8x32xf32>
    %73 = arith.mulf %68, %70 : vector<8x32xf32>
    %74 = arith.addf %72, %73 : vector<8x32xf32>
    %75 = math.tanh %74 : vector<8x32xf32>
    %76 = arith.mulf %71, %75 : vector<8x32xf32>
    %77 = vector.extract_strided_slice %76 {offsets = [4, 0], sizes = [4, 32], strides = [1, 1]} : vector<8x32xf32> to vector<4x32xf32>
    %c0_23 = arith.constant 0 : index
    %c0_24 = arith.constant 0 : index
    %78 = vector.load %arg13[%c0_23, %c0_24] : memref<32x32xf32, #tpu.memory_space<vmem>>, vector<4x32xf32>
    tpu.vector_store %arg13[%c0_23, %c0_24], %77 {strides = array<i32>} : memref<32x32xf32, #tpu.memory_space<vmem>>, vector<4x32xf32>,
    %79 = vector.extract_strided_slice %76 {offsets = [0, 0], sizes = [4, 32], strides = [1, 1]} : vector<8x32xf32> to vector<4x32xf32>
    %c8 = arith.constant 8 : index
    %c0_25 = arith.constant 0 : index
    %80 = vector.load %arg12[%c8, %c0_25] : memref<32x32xf32, #tpu.memory_space<vmem>>, vector<4x32xf32>
    %81 = tpu.concatenate %80, %79 in 0 : vector<4x32xf32>, vector<4x32xf32> -> vector<8x32xf32>
    %82 = tpu.concatenate %81, %76 in 1 : vector<8x32xf32>, vector<8x32xf32> -> vector<8x64xf32>
    %83 = arith.truncf %82 : vector<8x64xf32> to vector<8x64xbf16>
    %cst_26 = arith.constant dense<0.000000e+00> : vector<8x256xf32>
    %84 = tpu.matmul %83, %9, %cst_26 {dimension_numbers = #tpu.dot_dimension_numbers<[1], [0], [0], [1], [0, 0, 1, 1], [], []>} : vector<8x64xbf16>, vector<64x256xbf16>, vector<8x256xf32> -> vector<8x256xf32>
    %85 = vector.extract_strided_slice %84 {offsets = [0, 0], sizes = [8, 128], strides = [1, 1]} : vector<8x256xf32> to vector<8x128xf32>
    %86 = vector.extract_strided_slice %84 {offsets = [0, 128], sizes = [8, 128], strides = [1, 1]} : vector<8x256xf32> to vector<8x128xf32>
    %87 = arith.select %12, %85, %86 : vector<8x128xi1>, vector<8x128xf32>
    %88 = arith.addf %87, %22 : vector<8x128xf32>
    %89 = arith.negf %88 : vector<8x128xf32>
    %90 = math.exp %89 : vector<8x128xf32>
    %cst_27 = arith.constant 1.000000e+00 : f32
    %91 = vector.broadcast %cst_27 : f32 to vector<8x128xf32>
    %92 = arith.addf %91, %90 : vector<8x128xf32>
    %93 = arith.divf %91, %92 : vector<8x128xf32>
    %94 = math.tanh %88 : vector<8x128xf32>
    %95 = vector.extract_strided_slice %93 {offsets = [0, 0], sizes = [8, 32], strides = [1, 1]} : vector<8x128xf32> to vector<8x32xf32>
    %96 = vector.extract_strided_slice %93 {offsets = [0, 32], sizes = [8, 32], strides = [1, 1]} : vector<8x128xf32> to vector<8x32xf32>
    %97 = vector.extract_strided_slice %94 {offsets = [0, 64], sizes = [8, 32], strides = [1, 1]} : vector<8x128xf32> to vector<8x32xf32>
    %98 = vector.extract_strided_slice %93 {offsets = [0, 96], sizes = [8, 32], strides = [1, 1]} : vector<8x128xf32> to vector<8x32xf32>
    %99 = arith.mulf %96, %74 : vector<8x32xf32>
    %100 = arith.mulf %95, %97 : vector<8x32xf32>
    %101 = arith.addf %99, %100 : vector<8x32xf32>
    %102 = math.tanh %101 : vector<8x32xf32>
    %103 = arith.mulf %98, %102 : vector<8x32xf32>
    %104 = vector.extract_strided_slice %103 {offsets = [4, 0], sizes = [4, 32], strides = [1, 1]} : vector<8x32xf32> to vector<4x32xf32>
    %c4_28 = arith.constant 4 : index
    %c0_29 = arith.constant 0 : index
    %105 = vector.load %arg13[%c4_28, %c0_29] : memref<32x32xf32, #tpu.memory_space<vmem>>, vector<4x32xf32>
    tpu.vector_store %arg13[%c4_28, %c0_29], %104 {strides = array<i32>} : memref<32x32xf32, #tpu.memory_space<vmem>>, vector<4x32xf32>,
    %106 = vector.extract_strided_slice %103 {offsets = [0, 0], sizes = [4, 32], strides = [1, 1]} : vector<8x32xf32> to vector<4x32xf32>
    %c12 = arith.constant 12 : index
    %c0_30 = arith.constant 0 : index
    %107 = vector.load %arg12[%c12, %c0_30] : memref<32x32xf32, #tpu.memory_space<vmem>>, vector<4x32xf32>
    %108 = tpu.concatenate %107, %106 in 0 : vector<4x32xf32>, vector<4x32xf32> -> vector<8x32xf32>
    %109 = tpu.concatenate %108, %103 in 1 : vector<8x32xf32>, vector<8x32xf32> -> vector<8x64xf32>
    %110 = arith.truncf %109 : vector<8x64xf32> to vector<8x64xbf16>
    %cst_31 = arith.constant dense<0.000000e+00> : vector<8x256xf32>
    %111 = tpu.matmul %110, %9, %cst_31 {dimension_numbers = #tpu.dot_dimension_numbers<[1], [0], [0], [1], [0, 0, 1, 1], [], []>} : vector<8x64xbf16>, vector<64x256xbf16>, vector<8x256xf32> -> vector<8x256xf32>
    %112 = vector.extract_strided_slice %111 {offsets = [0, 0], sizes = [8, 128], strides = [1, 1]} : vector<8x256xf32> to vector<8x128xf32>
    %113 = vector.extract_strided_slice %111 {offsets = [0, 128], sizes = [8, 128], strides = [1, 1]} : vector<8x256xf32> to vector<8x128xf32>
    %114 = arith.select %12, %112, %113 : vector<8x128xi1>, vector<8x128xf32>
    %115 = arith.addf %114, %22 : vector<8x128xf32>
    %116 = arith.negf %115 : vector<8x128xf32>
    %117 = math.exp %116 : vector<8x128xf32>
    %cst_32 = arith.constant 1.000000e+00 : f32
    %118 = vector.broadcast %cst_32 : f32 to vector<8x128xf32>
    %119 = arith.addf %118, %117 : vector<8x128xf32>
    %120 = arith.divf %118, %119 : vector<8x128xf32>
    %121 = math.tanh %115 : vector<8x128xf32>
    %122 = vector.extract_strided_slice %120 {offsets = [0, 0], sizes = [8, 32], strides = [1, 1]} : vector<8x128xf32> to vector<8x32xf32>
    %123 = vector.extract_strided_slice %120 {offsets = [0, 32], sizes = [8, 32], strides = [1, 1]} : vector<8x128xf32> to vector<8x32xf32>
    %124 = vector.extract_strided_slice %121 {offsets = [0, 64], sizes = [8, 32], strides = [1, 1]} : vector<8x128xf32> to vector<8x32xf32>
    %125 = vector.extract_strided_slice %120 {offsets = [0, 96], sizes = [8, 32], strides = [1, 1]} : vector<8x128xf32> to vector<8x32xf32>
    %126 = arith.mulf %123, %101 : vector<8x32xf32>
    %127 = arith.mulf %122, %124 : vector<8x32xf32>
    %128 = arith.addf %126, %127 : vector<8x32xf32>
    %129 = math.tanh %128 : vector<8x32xf32>
    %130 = arith.mulf %125, %129 : vector<8x32xf32>
    %131 = vector.extract_strided_slice %130 {offsets = [4, 0], sizes = [4, 32], strides = [1, 1]} : vector<8x32xf32> to vector<4x32xf32>
    %c8_33 = arith.constant 8 : index
    %c0_34 = arith.constant 0 : index
    %132 = vector.load %arg13[%c8_33, %c0_34] : memref<32x32xf32, #tpu.memory_space<vmem>>, vector<4x32xf32>
    tpu.vector_store %arg13[%c8_33, %c0_34], %131 {strides = array<i32>} : memref<32x32xf32, #tpu.memory_space<vmem>>, vector<4x32xf32>,
    %133 = vector.extract_strided_slice %130 {offsets = [0, 0], sizes = [4, 32], strides = [1, 1]} : vector<8x32xf32> to vector<4x32xf32>
    %c16 = arith.constant 16 : index
    %c0_35 = arith.constant 0 : index
    %134 = vector.load %arg12[%c16, %c0_35] : memref<32x32xf32, #tpu.memory_space<vmem>>, vector<4x32xf32>
    %135 = tpu.concatenate %134, %133 in 0 : vector<4x32xf32>, vector<4x32xf32> -> vector<8x32xf32>
    %136 = tpu.concatenate %135, %130 in 1 : vector<8x32xf32>, vector<8x32xf32> -> vector<8x64xf32>
    %137 = arith.truncf %136 : vector<8x64xf32> to vector<8x64xbf16>
    %cst_36 = arith.constant dense<0.000000e+00> : vector<8x256xf32>
    %138 = tpu.matmul %137, %9, %cst_36 {dimension_numbers = #tpu.dot_dimension_numbers<[1], [0], [0], [1], [0, 0, 1, 1], [], []>} : vector<8x64xbf16>, vector<64x256xbf16>, vector<8x256xf32> -> vector<8x256xf32>
    %139 = vector.extract_strided_slice %138 {offsets = [0, 0], sizes = [8, 128], strides = [1, 1]} : vector<8x256xf32> to vector<8x128xf32>
    %140 = vector.extract_strided_slice %138 {offsets = [0, 128], sizes = [8, 128], strides = [1, 1]} : vector<8x256xf32> to vector<8x128xf32>
    %141 = arith.select %12, %139, %140 : vector<8x128xi1>, vector<8x128xf32>
    %142 = arith.addf %141, %22 : vector<8x128xf32>
    %143 = arith.negf %142 : vector<8x128xf32>
    %144 = math.exp %143 : vector<8x128xf32>
    %cst_37 = arith.constant 1.000000e+00 : f32
    %145 = vector.broadcast %cst_37 : f32 to vector<8x128xf32>
    %146 = arith.addf %145, %144 : vector<8x128xf32>
    %147 = arith.divf %145, %146 : vector<8x128xf32>
    %148 = math.tanh %142 : vector<8x128xf32>
    %149 = vector.extract_strided_slice %147 {offsets = [0, 0], sizes = [8, 32], strides = [1, 1]} : vector<8x128xf32> to vector<8x32xf32>
    %150 = vector.extract_strided_slice %147 {offsets = [0, 32], sizes = [8, 32], strides = [1, 1]} : vector<8x128xf32> to vector<8x32xf32>
    %151 = vector.extract_strided_slice %148 {offsets = [0, 64], sizes = [8, 32], strides = [1, 1]} : vector<8x128xf32> to vector<8x32xf32>
    %152 = vector.extract_strided_slice %147 {offsets = [0, 96], sizes = [8, 32], strides = [1, 1]} : vector<8x128xf32> to vector<8x32xf32>
    %153 = arith.mulf %150, %128 : vector<8x32xf32>
    %154 = arith.mulf %149, %151 : vector<8x32xf32>
    %155 = arith.addf %153, %154 : vector<8x32xf32>
    %156 = math.tanh %155 : vector<8x32xf32>
    %157 = arith.mulf %152, %156 : vector<8x32xf32>
    %158 = vector.extract_strided_slice %157 {offsets = [4, 0], sizes = [4, 32], strides = [1, 1]} : vector<8x32xf32> to vector<4x32xf32>
    %c12_38 = arith.constant 12 : index
    %c0_39 = arith.constant 0 : index
    %159 = vector.load %arg13[%c12_38, %c0_39] : memref<32x32xf32, #tpu.memory_space<vmem>>, vector<4x32xf32>
    tpu.vector_store %arg13[%c12_38, %c0_39], %158 {strides = array<i32>} : memref<32x32xf32, #tpu.memory_space<vmem>>, vector<4x32xf32>,
    %160 = vector.extract_strided_slice %157 {offsets = [0, 0], sizes = [4, 32], strides = [1, 1]} : vector<8x32xf32> to vector<4x32xf32>
    %c20 = arith.constant 20 : index
    %c0_40 = arith.constant 0 : index
    %161 = vector.load %arg12[%c20, %c0_40] : memref<32x32xf32, #tpu.memory_space<vmem>>, vector<4x32xf32>
    %162 = tpu.concatenate %161, %160 in 0 : vector<4x32xf32>, vector<4x32xf32> -> vector<8x32xf32>
    %163 = tpu.concatenate %162, %157 in 1 : vector<8x32xf32>, vector<8x32xf32> -> vector<8x64xf32>
    %164 = arith.truncf %163 : vector<8x64xf32> to vector<8x64xbf16>
    %cst_41 = arith.constant dense<0.000000e+00> : vector<8x256xf32>
    %165 = tpu.matmul %164, %9, %cst_41 {dimension_numbers = #tpu.dot_dimension_numbers<[1], [0], [0], [1], [0, 0, 1, 1], [], []>} : vector<8x64xbf16>, vector<64x256xbf16>, vector<8x256xf32> -> vector<8x256xf32>
    %166 = vector.extract_strided_slice %165 {offsets = [0, 0], sizes = [8, 128], strides = [1, 1]} : vector<8x256xf32> to vector<8x128xf32>
    %167 = vector.extract_strided_slice %165 {offsets = [0, 128], sizes = [8, 128], strides = [1, 1]} : vector<8x256xf32> to vector<8x128xf32>
    %168 = arith.select %12, %166, %167 : vector<8x128xi1>, vector<8x128xf32>
    %169 = arith.addf %168, %22 : vector<8x128xf32>
    %170 = arith.negf %169 : vector<8x128xf32>
    %171 = math.exp %170 : vector<8x128xf32>
    %cst_42 = arith.constant 1.000000e+00 : f32
    %172 = vector.broadcast %cst_42 : f32 to vector<8x128xf32>
    %173 = arith.addf %172, %171 : vector<8x128xf32>
    %174 = arith.divf %172, %173 : vector<8x128xf32>
    %175 = math.tanh %169 : vector<8x128xf32>
    %176 = vector.extract_strided_slice %174 {offsets = [0, 0], sizes = [8, 32], strides = [1, 1]} : vector<8x128xf32> to vector<8x32xf32>
    %177 = vector.extract_strided_slice %174 {offsets = [0, 32], sizes = [8, 32], strides = [1, 1]} : vector<8x128xf32> to vector<8x32xf32>
    %178 = vector.extract_strided_slice %175 {offsets = [0, 64], sizes = [8, 32], strides = [1, 1]} : vector<8x128xf32> to vector<8x32xf32>
    %179 = vector.extract_strided_slice %174 {offsets = [0, 96], sizes = [8, 32], strides = [1, 1]} : vector<8x128xf32> to vector<8x32xf32>
    %180 = arith.mulf %177, %155 : vector<8x32xf32>
    %181 = arith.mulf %176, %178 : vector<8x32xf32>
    %182 = arith.addf %180, %181 : vector<8x32xf32>
    %183 = math.tanh %182 : vector<8x32xf32>
    %184 = arith.mulf %179, %183 : vector<8x32xf32>
    %185 = vector.extract_strided_slice %184 {offsets = [4, 0], sizes = [4, 32], strides = [1, 1]} : vector<8x32xf32> to vector<4x32xf32>
    %c16_43 = arith.constant 16 : index
    %c0_44 = arith.constant 0 : index
    %186 = vector.load %arg13[%c16_43, %c0_44] : memref<32x32xf32, #tpu.memory_space<vmem>>, vector<4x32xf32>
    tpu.vector_store %arg13[%c16_43, %c0_44], %185 {strides = array<i32>} : memref<32x32xf32, #tpu.memory_space<vmem>>, vector<4x32xf32>,
    %187 = vector.extract_strided_slice %184 {offsets = [0, 0], sizes = [4, 32], strides = [1, 1]} : vector<8x32xf32> to vector<4x32xf32>
    %c24 = arith.constant 24 : index
    %c0_45 = arith.constant 0 : index
    %188 = vector.load %arg12[%c24, %c0_45] : memref<32x32xf32, #tpu.memory_space<vmem>>, vector<4x32xf32>
    %189 = tpu.concatenate %188, %187 in 0 : vector<4x32xf32>, vector<4x32xf32> -> vector<8x32xf32>
    %190 = tpu.concatenate %189, %184 in 1 : vector<8x32xf32>, vector<8x32xf32> -> vector<8x64xf32>
    %191 = arith.truncf %190 : vector<8x64xf32> to vector<8x64xbf16>
    %cst_46 = arith.constant dense<0.000000e+00> : vector<8x256xf32>
    %192 = tpu.matmul %191, %9, %cst_46 {dimension_numbers = #tpu.dot_dimension_numbers<[1], [0], [0], [1], [0, 0, 1, 1], [], []>} : vector<8x64xbf16>, vector<64x256xbf16>, vector<8x256xf32> -> vector<8x256xf32>
    %193 = vector.extract_strided_slice %192 {offsets = [0, 0], sizes = [8, 128], strides = [1, 1]} : vector<8x256xf32> to vector<8x128xf32>
    %194 = vector.extract_strided_slice %192 {offsets = [0, 128], sizes = [8, 128], strides = [1, 1]} : vector<8x256xf32> to vector<8x128xf32>
    %195 = arith.select %12, %193, %194 : vector<8x128xi1>, vector<8x128xf32>
    %196 = arith.addf %195, %22 : vector<8x128xf32>
    %197 = arith.negf %196 : vector<8x128xf32>
    %198 = math.exp %197 : vector<8x128xf32>
    %cst_47 = arith.constant 1.000000e+00 : f32
    %199 = vector.broadcast %cst_47 : f32 to vector<8x128xf32>
    %200 = arith.addf %199, %198 : vector<8x128xf32>
    %201 = arith.divf %199, %200 : vector<8x128xf32>
    %202 = math.tanh %196 : vector<8x128xf32>
    %203 = vector.extract_strided_slice %201 {offsets = [0, 0], sizes = [8, 32], strides = [1, 1]} : vector<8x128xf32> to vector<8x32xf32>
    %204 = vector.extract_strided_slice %201 {offsets = [0, 32], sizes = [8, 32], strides = [1, 1]} : vector<8x128xf32> to vector<8x32xf32>
    %205 = vector.extract_strided_slice %202 {offsets = [0, 64], sizes = [8, 32], strides = [1, 1]} : vector<8x128xf32> to vector<8x32xf32>
    %206 = vector.extract_strided_slice %201 {offsets = [0, 96], sizes = [8, 32], strides = [1, 1]} : vector<8x128xf32> to vector<8x32xf32>
    %207 = arith.mulf %204, %182 : vector<8x32xf32>
    %208 = arith.mulf %203, %205 : vector<8x32xf32>
    %209 = arith.addf %207, %208 : vector<8x32xf32>
    %210 = math.tanh %209 : vector<8x32xf32>
    %211 = arith.mulf %206, %210 : vector<8x32xf32>
    %212 = vector.extract_strided_slice %211 {offsets = [4, 0], sizes = [4, 32], strides = [1, 1]} : vector<8x32xf32> to vector<4x32xf32>
    %c20_48 = arith.constant 20 : index
    %c0_49 = arith.constant 0 : index
    %213 = vector.load %arg13[%c20_48, %c0_49] : memref<32x32xf32, #tpu.memory_space<vmem>>, vector<4x32xf32>
    tpu.vector_store %arg13[%c20_48, %c0_49], %212 {strides = array<i32>} : memref<32x32xf32, #tpu.memory_space<vmem>>, vector<4x32xf32>,
    %214 = vector.extract_strided_slice %211 {offsets = [0, 0], sizes = [4, 32], strides = [1, 1]} : vector<8x32xf32> to vector<4x32xf32>
    %c28 = arith.constant 28 : index
    %c0_50 = arith.constant 0 : index
    %215 = vector.load %arg12[%c28, %c0_50] : memref<32x32xf32, #tpu.memory_space<vmem>>, vector<4x32xf32>
    %216 = tpu.concatenate %215, %214 in 0 : vector<4x32xf32>, vector<4x32xf32> -> vector<8x32xf32>
    %217 = tpu.concatenate %216, %211 in 1 : vector<8x32xf32>, vector<8x32xf32> -> vector<8x64xf32>
    %218 = arith.truncf %217 : vector<8x64xf32> to vector<8x64xbf16>
    %cst_51 = arith.constant dense<0.000000e+00> : vector<8x256xf32>
    %219 = tpu.matmul %218, %9, %cst_51 {dimension_numbers = #tpu.dot_dimension_numbers<[1], [0], [0], [1], [0, 0, 1, 1], [], []>} : vector<8x64xbf16>, vector<64x256xbf16>, vector<8x256xf32> -> vector<8x256xf32>
    %220 = vector.extract_strided_slice %219 {offsets = [0, 0], sizes = [8, 128], strides = [1, 1]} : vector<8x256xf32> to vector<8x128xf32>
    %221 = vector.extract_strided_slice %219 {offsets = [0, 128], sizes = [8, 128], strides = [1, 1]} : vector<8x256xf32> to vector<8x128xf32>
    %222 = arith.select %12, %220, %221 : vector<8x128xi1>, vector<8x128xf32>
    %223 = arith.addf %222, %22 : vector<8x128xf32>
    %224 = arith.negf %223 : vector<8x128xf32>
    %225 = math.exp %224 : vector<8x128xf32>
    %cst_52 = arith.constant 1.000000e+00 : f32
    %226 = vector.broadcast %cst_52 : f32 to vector<8x128xf32>
    %227 = arith.addf %226, %225 : vector<8x128xf32>
    %228 = arith.divf %226, %227 : vector<8x128xf32>
    %229 = math.tanh %223 : vector<8x128xf32>
    %230 = vector.extract_strided_slice %228 {offsets = [0, 0], sizes = [8, 32], strides = [1, 1]} : vector<8x128xf32> to vector<8x32xf32>
    %231 = vector.extract_strided_slice %228 {offsets = [0, 32], sizes = [8, 32], strides = [1, 1]} : vector<8x128xf32> to vector<8x32xf32>
    %232 = vector.extract_strided_slice %229 {offsets = [0, 64], sizes = [8, 32], strides = [1, 1]} : vector<8x128xf32> to vector<8x32xf32>
    %233 = vector.extract_strided_slice %228 {offsets = [0, 96], sizes = [8, 32], strides = [1, 1]} : vector<8x128xf32> to vector<8x32xf32>
    %234 = arith.mulf %231, %209 : vector<8x32xf32>
    %235 = arith.mulf %230, %232 : vector<8x32xf32>
    %236 = arith.addf %234, %235 : vector<8x32xf32>
    %237 = math.tanh %236 : vector<8x32xf32>
    %238 = arith.mulf %233, %237 : vector<8x32xf32>
    %239 = vector.extract_strided_slice %238 {offsets = [4, 0], sizes = [4, 32], strides = [1, 1]} : vector<8x32xf32> to vector<4x32xf32>
    %c24_53 = arith.constant 24 : index
    %c0_54 = arith.constant 0 : index
    %240 = vector.load %arg13[%c24_53, %c0_54] : memref<32x32xf32, #tpu.memory_space<vmem>>, vector<4x32xf32>
    tpu.vector_store %arg13[%c24_53, %c0_54], %239 {strides = array<i32>} : memref<32x32xf32, #tpu.memory_space<vmem>>, vector<4x32xf32>,
    %241 = vector.extract_strided_slice %238 {offsets = [0, 0], sizes = [4, 32], strides = [1, 1]} : vector<8x32xf32> to vector<4x32xf32>
    %cst_55 = arith.constant 0.000000e+00 : f32
    %242 = vector.broadcast %cst_55 : f32 to vector<4x32xf32>
    %243 = tpu.concatenate %242, %241 in 0 : vector<4x32xf32>, vector<4x32xf32> -> vector<8x32xf32>
    %244 = tpu.concatenate %243, %238 in 1 : vector<8x32xf32>, vector<8x32xf32> -> vector<8x64xf32>
    %245 = arith.truncf %244 : vector<8x64xf32> to vector<8x64xbf16>
    %cst_56 = arith.constant dense<0.000000e+00> : vector<8x256xf32>
    %246 = tpu.matmul %245, %9, %cst_56 {dimension_numbers = #tpu.dot_dimension_numbers<[1], [0], [0], [1], [0, 0, 1, 1], [], []>} : vector<8x64xbf16>, vector<64x256xbf16>, vector<8x256xf32> -> vector<8x256xf32>
    %247 = vector.extract_strided_slice %246 {offsets = [0, 0], sizes = [8, 128], strides = [1, 1]} : vector<8x256xf32> to vector<8x128xf32>
    %248 = vector.extract_strided_slice %246 {offsets = [0, 128], sizes = [8, 128], strides = [1, 1]} : vector<8x256xf32> to vector<8x128xf32>
    %249 = arith.select %12, %247, %248 : vector<8x128xi1>, vector<8x128xf32>
    %250 = arith.addf %249, %22 : vector<8x128xf32>
    %251 = arith.negf %250 : vector<8x128xf32>
    %252 = math.exp %251 : vector<8x128xf32>
    %cst_57 = arith.constant 1.000000e+00 : f32
    %253 = vector.broadcast %cst_57 : f32 to vector<8x128xf32>
    %254 = arith.addf %253, %252 : vector<8x128xf32>
    %255 = arith.divf %253, %254 : vector<8x128xf32>
    %256 = math.tanh %250 : vector<8x128xf32>
    %257 = vector.extract_strided_slice %255 {offsets = [0, 0], sizes = [8, 32], strides = [1, 1]} : vector<8x128xf32> to vector<8x32xf32>
    %258 = vector.extract_strided_slice %255 {offsets = [0, 32], sizes = [8, 32], strides = [1, 1]} : vector<8x128xf32> to vector<8x32xf32>
    %259 = vector.extract_strided_slice %256 {offsets = [0, 64], sizes = [8, 32], strides = [1, 1]} : vector<8x128xf32> to vector<8x32xf32>
    %260 = vector.extract_strided_slice %255 {offsets = [0, 96], sizes = [8, 32], strides = [1, 1]} : vector<8x128xf32> to vector<8x32xf32>
    %261 = arith.mulf %258, %236 : vector<8x32xf32>
    %262 = arith.mulf %257, %259 : vector<8x32xf32>
    %263 = arith.addf %261, %262 : vector<8x32xf32>
    %264 = math.tanh %263 : vector<8x32xf32>
    %265 = arith.mulf %260, %264 : vector<8x32xf32>
    %266 = arith.select %15, %238, %265 : vector<8x32xi1>, vector<8x32xf32>
    %267 = arith.select %15, %236, %263 : vector<8x32xi1>, vector<8x32xf32>
    %268 = vector.extract_strided_slice %266 {offsets = [4, 0], sizes = [4, 32], strides = [1, 1]} : vector<8x32xf32> to vector<4x32xf32>
    %c28_58 = arith.constant 28 : index
    %c0_59 = arith.constant 0 : index
    %269 = vector.load %arg13[%c28_58, %c0_59] : memref<32x32xf32, #tpu.memory_space<vmem>>, vector<4x32xf32>
    tpu.vector_store %arg13[%c28_58, %c0_59], %268 {strides = array<i32>} : memref<32x32xf32, #tpu.memory_space<vmem>>, vector<4x32xf32>,
    %c0_60 = arith.constant 0 : index
    %c0_61 = arith.constant 0 : index
    %270 = vector.load %arg10[%c0_60, %c0_61] : memref<8x32xf32, #tpu.memory_space<vmem>>, vector<8x32xf32>
    tpu.vector_store %arg10[%c0_60, %c0_61], %266 {strides = array<i32>} : memref<8x32xf32, #tpu.memory_space<vmem>>, vector<8x32xf32>,
    %c0_62 = arith.constant 0 : index
    %c0_63 = arith.constant 0 : index
    %271 = vector.load %arg11[%c0_62, %c0_63] : memref<8x32xf32, #tpu.memory_space<vmem>>, vector<8x32xf32>
    tpu.vector_store %arg11[%c0_62, %c0_63], %267 {strides = array<i32>} : memref<8x32xf32, #tpu.memory_space<vmem>>, vector<8x32xf32>,
    %c0_64 = arith.constant 0 : index
    %c0_65 = arith.constant 0 : index
    %272 = vector.load %arg13[%c0_64, %c0_65] : memref<32x32xf32, #tpu.memory_space<vmem>>, vector<32x32xf32>
    %273 = arith.truncf %272 : vector<32x32xf32> to vector<32x32xbf16>
    %c0_66 = arith.constant 0 : index
    %c0_67 = arith.constant 0 : index
    %274 = vector.load %arg7[%c0_66, %c0_67] : memref<32x128xbf16, #tpu.memory_space<vmem>>, vector<32x128xbf16>
    %cst_68 = arith.constant dense<0.000000e+00> : vector<32x128xf32>
    %275 = tpu.matmul %273, %274, %cst_68 {dimension_numbers = #tpu.dot_dimension_numbers<[1], [0], [0], [1], [0, 0, 1, 1], [], []>} : vector<32x32xbf16>, vector<32x128xbf16>, vector<32x128xf32> -> vector<32x128xf32>
    %c0_69 = arith.constant 0 : index
    %c0_70 = arith.constant 0 : index
    %276 = vector.load %arg8[%c0_69, %c0_70] : memref<1x128xf32, #tpu.memory_space<vmem>>, vector<1x128xf32>
    %277 = vector.broadcast %276 : vector<1x128xf32> to vector<32x128xf32>
    %278 = arith.addf %275, %277 : vector<32x128xf32>
    %c0_71 = arith.constant 0 : index
    %c0_72 = arith.constant 0 : index
    %279 = vector.load %arg9[%c0_71, %c0_72] : memref<32x128xf32, #tpu.memory_space<vmem>>, vector<32x128xf32>
    tpu.vector_store %arg9[%c0_71, %c0_72], %278 {strides = array<i32>} : memref<32x128xf32, #tpu.memory_space<vmem>>, vector<32x128xf32>,
    return
  }
}

</mosaic_0001>

<llo_original>
// kernel: forward.1
$region0: #{forward.1}
  #allocation0 [shape = 'u32[]', space=smem, size = 0x4, offset = 0x4, fixed_abs, tag = 'smem constant byte address 0x4 - core index']
  #allocation1 [shape = 'u32[144,128]{1,0:T(1,128)}', space=vmem, size = 0x12000, scoped, tag = 'internal scratch']
  #allocation2 [shape = 'f32[32,32]{1,0:T(8,128)}', space=vmem, size = 0x4000, scoped, tag = 'scratch operand']
  #allocation3 [shape = 'f32[32,32]{1,0:T(8,128)}', space=vmem, size = 0x4000, scoped, tag = 'scratch operand']
  %s0 = inlined_call_operand.vmem [shape: s32[32,1], index: 0, kind: input, shape index: {}]
  %s1 = inlined_call_operand.vmem [shape: f32[8,32], index: 1, kind: input, shape index: {}, may-alias: {1,2}]
  %s2 = inlined_call_operand.vmem [shape: f32[8,32], index: 2, kind: input, shape index: {}, may-alias: {1,2}]
  %s3 = inlined_call_operand.vmem [shape: f32[128,32], index: 3, kind: input, shape index: {}]
  %s4 = inlined_call_operand.vmem [shape: bf16[64,256], index: 4, kind: input, shape index: {}]
  %s5 = inlined_call_operand.vmem [shape: f32[1,128], index: 5, kind: input, shape index: {}]
  %s6 = inlined_call_operand.vmem [shape: f32[1,128], index: 6, kind: input, shape index: {}]
  %s7 = inlined_call_operand.vmem [shape: bf16[32,128], index: 7, kind: input, shape index: {}]
  %s8 = inlined_call_operand.vmem [shape: f32[1,128], index: 8, kind: input, shape index: {}]
  %s9 = inlined_call_operand.hbm [shape: f32[32,128], index: 9, kind: output, shape index: {0}]
  %s10 = inlined_call_operand.hbm [shape: f32[8,32], index: 10, kind: output, shape index: {1}]
  %s11 = inlined_call_operand.hbm [shape: f32[8,32], index: 11, kind: output, shape index: {2}]
  %12 = xla_tuple %s9, %s10, %s11
  %s13 = sld [smem:[#allocation0]]
  $region62: #{forward.1} parent=0
    _
  %s15 = ssub.s32 1, %s13
  %s16 = scalar_select 0, %s15, %s13
  $region1: #{forward.1} parent=0
    #allocation4 [shape = 'u8[16384]{0}', space=vmem, size = 0x4000, scoped, tag = 'output window, operand 0, single buffered']
    #allocation5 [shape = 's32[1]{0}', space=sflag, size = 0x4, scoped, tag = 'scoped memory for forward.1']
    #allocation6 [shape = 'u8[4096]{0}', space=vmem, size = 0x1000, scoped, tag = 'output window, operand 1, single buffered']
    #allocation7 [shape = 's32[1]{0}', space=sflag, size = 0x4, scoped, tag = 'scoped memory for forward.1']
    #allocation8 [shape = 'u8[4096]{0}', space=vmem, size = 0x1000, scoped, tag = 'output window, operand 2, single buffered']
    %17 = vsyncpa [#allocation5], 0
    %18 = vsyncpa [#allocation7], 0
    // Predicated region
    $region2: #{forward.1} parent=1 // pred_check
      _
    $region3: #{forward.1} parent=1 // pred_check_branch
      %20 = sbr.rel (0) target = $region5
    $region4: #{forward.1} parent=1 // pred_region
      _
    $region5: #{forward.1} parent=1 // pred_fallthru
      _
    // Predicated region
    $region6: #{forward.1} parent=1 // pred_check
      _
    $region7: #{forward.1} parent=1 // pred_check_branch
      %22 = sbr.rel (0) target = $region9
    $region8: #{forward.1} parent=1 // pred_region
      _
    $region9: #{forward.1} parent=1 // pred_fallthru
      _
    // Predicated region
    $region10: #{forward.1} parent=1 // pred_check
      _
    $region11: #{forward.1} parent=1 // pred_check_branch
      %24 = sbr.rel (0) target = $region13
    $region12: #{forward.1} parent=1 // pred_region
      _
    $region13: #{forward.1} parent=1 // pred_fallthru
      _
    // Predicated region
    $region14: #{forward.1} parent=1 // pred_check
      _
    $region15: #{forward.1} parent=1 // pred_check_branch
      %26 = sbr.rel (0) target = $region17
    $region16: #{forward.1} parent=1 // pred_region
      _
    $region17: #{forward.1} parent=1 // pred_fallthru
      _
    // Predicated region
    $region18: #{forward.1} parent=1 // pred_check
      _
    $region19: #{forward.1} parent=1 // pred_check_branch
      %28 = sbr.rel (0) target = $region21
    $region20: #{forward.1} parent=1 // pred_region
      _
    $region21: #{forward.1} parent=1 // pred_fallthru
      _
    // Predicated region
    $region22: #{forward.1} parent=1 // pred_check
      _
    $region23: #{forward.1} parent=1 // pred_check_branch
      %30 = sbr.rel (0) target = $region25
    $region24: #{forward.1} parent=1 // pred_region
      _
    $region25: #{forward.1} parent=1 // pred_fallthru
      _
    // Predicated region
    $region26: #{forward.1} parent=1 // pred_check
      _
    $region27: #{forward.1} parent=1 // pred_check_branch
      %32 = sbr.rel (0) target = $region29
    $region28: #{forward.1} parent=1 // pred_region
      _
    $region29: #{forward.1} parent=1 // pred_fallthru
      _
    // Predicated region
    $region30: #{forward.1} parent=1 // pred_check
      _
    $region31: #{forward.1} parent=1 // pred_check_branch
      %34 = sbr.rel (0) target = $region33
    $region32: #{forward.1} parent=1 // pred_region
      _
    $region33: #{forward.1} parent=1 // pred_fallthru
      _
    // Predicated region
    $region34: #{forward.1} parent=1 // pred_check
      _
    $region35: #{forward.1} parent=1 // pred_check_branch
      %36 = sbr.rel (0) target = $region37
    $region36: #{forward.1} parent=1 // pred_region
      _
    $region37: #{forward.1} parent=1 // pred_fallthru
      _
    %v38 = vld [vmem:[%s0] sm:$0xff]
    %v39 = vld [vmem:[%s0 + $0x8] sm:$0xff]
    %v40 = vld [vmem:[%s0 + $0x10] sm:$0xff]
    %v41 = vld [vmem:[%s0 + $0x18] sm:$0xff]
    %v42 = vlaneseq
    %v43 = vand.u32 %v42, 127
    %44 = vset.pattern.permute.xlu0 0
    %45 = vperm.xlu0 %44, %v38
    %v46 = vpop.permute.xlu0 %45
    %47 = vset.pattern.permute.xlu0 0
    %48 = vperm.xlu0 %47, %v39
    %v49 = vpop.permute.xlu0 %48
    %50 = vset.pattern.permute.xlu0 0
    %51 = vperm.xlu0 %50, %v40
    %v52 = vpop.permute.xlu0 %51
    %53 = vset.pattern.permute.xlu0 0
    %54 = vperm.xlu0 %53, %v41
    %v55 = vpop.permute.xlu0 %54
    %vm56 = vcmp.eq.s32.totalorder %v46, %v43
    %vm57 = vcmp.eq.s32.totalorder %v49, %v43
    %vm58 = vcmp.eq.s32.totalorder %v52, %v43
    %vm59 = vcmp.eq.s32.totalorder %v55, %v43
    %v60 = vsel %vm56, 1, 0
    %v61 = vsel %vm57, 1, 0
    %v62 = vsel %vm58, 1, 0
    %v63 = vsel %vm59, 1, 0
    %v64 = vcvt.s32.f32 %v60
    %v65 = vcvt.s32.f32 %v61
    %v66 = vcvt.s32.f32 %v62
    %v67 = vcvt.s32.f32 %v63
    %v68 = vld [vmem:[%s3] sm:$0xff]
    %v69 = vld [vmem:[%s3 + $0x8] sm:$0xff]
    %v70 = vld [vmem:[%s3 + $0x10] sm:$0xff]
    %v71 = vld [vmem:[%s3 + $0x18] sm:$0xff]
    %v72 = vld [vmem:[%s3 + $0x20] sm:$0xff]
    %v73 = vld [vmem:[%s3 + $0x28] sm:$0xff]
    %v74 = vld [vmem:[%s3 + $0x30] sm:$0xff]
    %v75 = vld [vmem:[%s3 + $0x38] sm:$0xff]
    %v76 = vld [vmem:[%s3 + $0x40] sm:$0xff]
    %v77 = vld [vmem:[%s3 + $0x48] sm:$0xff]
    %v78 = vld [vmem:[%s3 + $0x50] sm:$0xff]
    %v79 = vld [vmem:[%s3 + $0x58] sm:$0xff]
    %v80 = vld [vmem:[%s3 + $0x60] sm:$0xff]
    %v81 = vld [vmem:[%s3 + $0x68] sm:$0xff]
    %v82 = vld [vmem:[%s3 + $0x70] sm:$0xff]
    %v83 = vld [vmem:[%s3 + $0x78] sm:$0xff]
    %84 = vmatprep.subr.mxu0 0.0
    %85 = vmatpush1.msra.mxu0 %v68
    %86 = vmatprep.subr.mxu0 0.0
    %87 = vmatpush1.msra.mxu0 %v69
    %88 = vmatprep.subr.mxu0 0.0
    %89 = vmatpush1.msra.mxu0 %v70
    %90 = vmatprep.subr.mxu0 0.0
    %91 = vmatpush1.msra.mxu0 %v71
    %92 = vmatprep.subr.mxu0 0.0
    %93 = vmatpush1.msra.mxu0 %v72
    %94 = vmatprep.subr.mxu0 0.0
    %95 = vmatpush1.msra.mxu0 %v73
    %96 = vmatprep.subr.mxu0 0.0
    %97 = vmatpush1.msra.mxu0 %v74
    %98 = vmatprep.subr.mxu0 0.0
    %99 = vmatpush1.msra.mxu0 %v75
    %100 = vmatprep.subr.mxu0 0.0
    %101 = vmatpush1.msra.mxu0 %v76
    %102 = vmatprep.subr.mxu0 0.0
    %103 = vmatpush1.msra.mxu0 %v77
    %104 = vmatprep.subr.mxu0 0.0
    %105 = vmatpush1.msra.mxu0 %v78
    %106 = vmatprep.subr.mxu0 0.0
    %107 = vmatpush1.msra.mxu0 %v79
    %108 = vmatprep.subr.mxu0 0.0
    %109 = vmatpush1.msra.mxu0 %v80
    %110 = vmatprep.subr.mxu0 0.0
    %111 = vmatpush1.msra.mxu0 %v81
    %112 = vmatprep.subr.mxu0 0.0
    %113 = vmatpush1.msra.mxu0 %v82
    %114 = vmatprep.subr.mxu0 0.0
    %115 = vmatpush1.msra.mxu0 %v83
    %116 = vmatprep.subr.mxu0 0.0
    %117 = vmatpush1.msra.mxu0 0.0
    %118 = vmatprep.subr.mxu0 0.0
    %119 = vmatpush1.msra.mxu0 0.0
    %120 = vmatprep.subr.mxu0 0.0
    %121 = vmatpush1.msra.mxu0 0.0
    %122 = vmatprep.subr.mxu0 0.0
    %123 = vmatpush1.msra.mxu0 0.0
    %124 = vmatprep.subr.mxu0 0.0
    %125 = vmatpush1.msra.mxu0 0.0
    %126 = vmatprep.subr.mxu0 0.0
    %127 = vmatpush1.msra.mxu0 0.0
    %128 = vmatprep.subr.mxu0 0.0
    %129 = vmatpush1.msra.mxu0 0.0
    %130 = vmatprep.subr.mxu0 0.0
    %131 = vmatpush1.msra.mxu0 0.0
    %132 = vmatprep.subr.mxu0 0.0
    %133 = vmatpush1.msra.mxu0 0.0
    %134 = vmatprep.subr.mxu0 0.0
    %135 = vmatpush1.msra.mxu0 0.0
    %136 = vmatprep.subr.mxu0 0.0
    %137 = vmatpush1.msra.mxu0 0.0
    %138 = vmatprep.subr.mxu0 0.0
    %139 = vmatpush1.msra.mxu0 0.0
    %140 = vmatprep.subr.mxu0 0.0
    %141 = vmatpush1.msra.mxu0 0.0
    %142 = vmatprep.subr.mxu0 0.0
    %143 = vmatpush1.msra.mxu0 0.0
    %144 = vmatprep.subr.mxu0 0.0
    %145 = vmatpush1.msra.mxu0 0.0
    %146 = vmatprep.subr.mxu0 0.0
    %147 = vmatpush1.msra.mxu0 0.0
    %148 = vmatprep.mubr.f32.mxu0 0.0
    %149 = vmatmul.mubr.f32.gmra.mrb[0].mxu0 %v64
    %v150 = vpop.f32.mrb[0].mxu0
    %v151 = vadd.f32 0.0, %v150
    %v152 = vpop.f32.mrb[0].mxu0
    %153 = vmatprep.mubr.f32.mxu0 0.0
    %154 = vmatmul.mubr.f32.gmra.mrb[0].mxu0 %v65
    %v155 = vpop.f32.mrb[0].mxu0
    %v156 = vadd.f32 0.0, %v155
    %v157 = vpop.f32.mrb[0].mxu0
    %158 = vmatprep.mubr.f32.mxu0 0.0
    %159 = vmatmul.mubr.f32.gmra.mrb[0].mxu0 %v66
    %v160 = vpop.f32.mrb[0].mxu0
    %v161 = vadd.f32 0.0, %v160
    %v162 = vpop.f32.mrb[0].mxu0
    %163 = vmatprep.mubr.f32.mxu0 0.0
    %164 = vmatmul.mubr.f32.gmra.mrb[0].mxu0 %v67
    %v165 = vpop.f32.mrb[0].mxu0
    %v166 = vadd.f32 0.0, %v165
    %v167 = vpop.f32.mrb[0].mxu0
    %168 = vdwg.mxu0
    %vm169 = vcmask 261120
    %170 = vst.msk [vmem:[#allocation2] sm:$0xff] %vm169, %v151
    %171 = vst.msk [vmem:[#allocation2 + $0x8] sm:$0xff] %vm169, %v156
    %172 = vst.msk [vmem:[#allocation2 + $0x10] sm:$0xff] %vm169, %v161
    %173 = vst.msk [vmem:[#allocation2 + $0x18] sm:$0xff] %vm169, %v166
    %v174 = vld [vmem:[%s4] sm:$0xff]
    %v175 = vld [vmem:[%s4 + $0x8] sm:$0xff]
    %v176 = vld [vmem:[%s4 + $0x10] sm:$0xff]
    %v177 = vld [vmem:[%s4 + $0x18] sm:$0xff]
    %v178 = vld [vmem:[%s4 + $0x20] sm:$0xff]
    %v179 = vld [vmem:[%s4 + $0x28] sm:$0xff]
    %v180 = vld [vmem:[%s4 + $0x30] sm:$0xff]
    %v181 = vld [vmem:[%s4 + $0x38] sm:$0xff]
    %v182 = vlaneseq
    %v183 = vshrl.u32 %v182, 7
    %vm184 = vcmp.lt.s32.totalorder %v183, 4
    %v185 = vld [vmem:[%s5] sm:$0x1]
    %v186 = vld [vmem:[%s6] sm:$0x1]
    %v188 = vlaneseq
    %v189 = vshrl.u32 %v188, 7
    %v190 = vsub.s32 0, %v189
    %v191 = vrot.slane %v185, %v190
    %v194 = vlaneseq
    %v195 = vshrl.u32 %v194, 7
    %v196 = vsub.s32 0, %v195
    %v197 = vrot.slane %v186, %v196
    %v199 = vsel %vm184, %v191, %v197
    %v200 = vld [vmem:[%s1] sm:$0xff]
    %v201 = vld [vmem:[%s2] sm:$0xff]
    %v202 = vld [vmem:[#allocation2] sm:$0xf]
    %v204 = vrot.slane %v200, 4
    %vm206 = vcmask 1043456
    %v207 = vsel %vm206, %v202, %v204
    %208 = vrot.lane.b32.xlu0 %v200, 32
    %v209 = vpop.permute.xlu0 %208
    %v211 = vsel %vm169, %v207, %v209
    %v212 = vpack.c.bf16 %v211, %v211
    %v221 = vunpack.c.l.b16 %v174
    %v222 = vunpack.c.h.b16 %v174
    %v223 = vunpack.c.l.b16 %v175
    %v224 = vunpack.c.h.b16 %v175
    %v225 = vunpack.c.l.b16 %v176
    %v226 = vunpack.c.h.b16 %v176
    %v227 = vunpack.c.l.b16 %v177
    %v228 = vunpack.c.h.b16 %v177
    %v229 = vunpack.c.l.b16 %v178
    %v230 = vunpack.c.h.b16 %v178
    %v231 = vunpack.c.l.b16 %v179
    %v232 = vunpack.c.h.b16 %v179
    %v233 = vunpack.c.l.b16 %v180
    %v234 = vunpack.c.h.b16 %v180
    %v235 = vunpack.c.l.b16 %v181
    %v236 = vunpack.c.h.b16 %v181
    %v237 = vpack.c.b16 %v223, %v221
    %v238 = vpack.c.b16 %v224, %v222
    %v239 = vpack.c.b16 %v227, %v225
    %v240 = vpack.c.b16 %v228, %v226
    %v241 = vpack.c.b16 %v231, %v229
    %v242 = vpack.c.b16 %v232, %v230
    %v243 = vpack.c.b16 %v235, %v233
    %v244 = vpack.c.b16 %v236, %v234
    %vm253 = vcmask 523264
    %v255 = vsel %vm253, %v212, 0
    %257 = vmatprep.subr.bf16.mxu0 %v238
    %258 = vmatpush1.bf16.msra.mxu0 %v237
    %259 = vmatprep.subr.bf16.mxu0 %v240
    %260 = vmatpush1.bf16.msra.mxu0 %v239
    %261 = vmatprep.subr.bf16.mxu0 %v242
    %262 = vmatpush1.bf16.msra.mxu0 %v241
    %263 = vmatprep.subr.bf16.mxu0 %v244
    %264 = vmatpush1.bf16.msra.mxu0 %v243
    %265 = vmatprep.subr.bf16.mxu0 0
    %266 = vmatpush1.bf16.msra.mxu0 0
    %267 = vmatprep.subr.bf16.mxu0 0
    %268 = vmatpush1.bf16.msra.mxu0 0
    %269 = vmatprep.subr.bf16.mxu0 0
    %270 = vmatpush1.bf16.msra.mxu0 0
    %271 = vmatprep.subr.bf16.mxu0 0
    %272 = vmatpush1.bf16.msra.mxu0 0
    %273 = vmatprep.subr.bf16.mxu0 0
    %274 = vmatpush1.bf16.msra.mxu0 0
    %275 = vmatprep.subr.bf16.mxu0 0
    %276 = vmatpush1.bf16.msra.mxu0 0
    %277 = vmatprep.subr.bf16.mxu0 0
    %278 = vmatpush1.bf16.msra.mxu0 0
    %279 = vmatprep.subr.bf16.mxu0 0
    %280 = vmatpush1.bf16.msra.mxu0 0
    %281 = vmatprep.subr.bf16.mxu0 0
    %282 = vmatpush1.bf16.msra.mxu0 0
    %283 = vmatprep.subr.bf16.mxu0 0
    %284 = vmatpush1.bf16.msra.mxu0 0
    %285 = vmatprep.subr.bf16.mxu0 0
    %286 = vmatpush1.bf16.msra.mxu0 0
    %287 = vmatprep.subr.bf16.mxu0 0
    %288 = vmatpush1.bf16.msra.mxu0 0
    %289 = vmatprep.mubr.bf16.mxu0 0
    %290 = vmatmul.mubr.bf16.gmra.mrb[0].mxu0 %v255
    %v291 = vpop.f32.mrb[0].mxu0
    %v292 = vadd.f32 0.0, %v291
    %v293 = vpop.f32.mrb[0].mxu0
    %v294 = vadd.f32 0.0, %v293
    %v295 = vpop.f32.mrb[0].mxu0
    %v296 = vpop.f32.mrb[0].mxu0
    %297 = vdwg.mxu0
    %v298 = vsel %vm184, %v292, %v294
    %v299 = vadd.f32 %v298, %v199
    %v300 = vxor.u32 %v299, 2147483648
    %v301 = vmul.f32 %v300, 1.442695
    %v302 = vpow.pop %v301
    %v303 = vadd.f32 %v302, 1.0
    %v304 = vrcp.pop %v303
    %v305 = vmul.f32 1.0, %v304
    %v306 = vtanh.pop %v299
    %308 = vrot.lane.b32.xlu0 %v201, 32
    %v309 = vpop.permute.xlu0 %308
    %v311 = vmul.f32 %v305, %v309
    %313 = vrot.lane.b32.xlu0 %v306, 64
    %v314 = vpop.permute.xlu0 %313
    %v316 = vmul.f32 %v305, %v314
    %318 = vrot.lane.b32.xlu0 %v316, 32
    %v319 = vpop.permute.xlu0 %318
    %v321 = vadd.f32 %v311, %v319
    %v322 = vtanh.pop %v321
    %324 = vrot.lane.b32.xlu0 %v322, 64
    %v325 = vpop.permute.xlu0 %324
    %v327 = vmul.f32 %v305, %v325
    %328 = vrot.lane.b32.xlu0 %v200, 96
    %v329 = vpop.permute.xlu0 %328
    %v331 = vsel %vm184, %v327, %v329
    %v332 = vsel %vm184, %v321, %v309
    %v333 = vld [vmem:[#allocation2 + $0x4] sm:$0xf]
    %v335 = vrot.slane %v331, 4
    %336 = vrot.lane.b32.xlu0 %v335, 32
    %v337 = vpop.permute.xlu0 %336
    %v339 = vsel %vm206, %v333, %v337
    %340 = vrot.lane.b32.xlu0 %v331, 64
    %v341 = vpop.permute.xlu0 %340
    %v343 = vsel %vm169, %v339, %v341
    %v344 = vpack.c.bf16 %v343, %v343
    %v346 = vsel %vm253, %v344, 0
    %348 = vmatprep.subr.bf16.mxu0 %v238
    %349 = vmatpush1.bf16.msra.mxu0 %v237
    %350 = vmatprep.subr.bf16.mxu0 %v240
    %351 = vmatpush1.bf16.msra.mxu0 %v239
    %352 = vmatprep.subr.bf16.mxu0 %v242
    %353 = vmatpush1.bf16.msra.mxu0 %v241
    %354 = vmatprep.subr.bf16.mxu0 %v244
    %355 = vmatpush1.bf16.msra.mxu0 %v243
    %356 = vmatprep.subr.bf16.mxu0 0
    %357 = vmatpush1.bf16.msra.mxu0 0
    %358 = vmatprep.subr.bf16.mxu0 0
    %359 = vmatpush1.bf16.msra.mxu0 0
    %360 = vmatprep.subr.bf16.mxu0 0
    %361 = vmatpush1.bf16.msra.mxu0 0
    %362 = vmatprep.subr.bf16.mxu0 0
    %363 = vmatpush1.bf16.msra.mxu0 0
    %364 = vmatprep.subr.bf16.mxu0 0
    %365 = vmatpush1.bf16.msra.mxu0 0
    %366 = vmatprep.subr.bf16.mxu0 0
    %367 = vmatpush1.bf16.msra.mxu0 0
    %368 = vmatprep.subr.bf16.mxu0 0
    %369 = vmatpush1.bf16.msra.mxu0 0
    %370 = vmatprep.subr.bf16.mxu0 0
    %371 = vmatpush1.bf16.msra.mxu0 0
    %372 = vmatprep.subr.bf16.mxu0 0
    %373 = vmatpush1.bf16.msra.mxu0 0
    %374 = vmatprep.subr.bf16.mxu0 0
    %375 = vmatpush1.bf16.msra.mxu0 0
    %376 = vmatprep.subr.bf16.mxu0 0
    %377 = vmatpush1.bf16.msra.mxu0 0
    %378 = vmatprep.subr.bf16.mxu0 0
    %379 = vmatpush1.bf16.msra.mxu0 0
    %380 = vmatprep.mubr.bf16.mxu0 0
    %381 = vmatmul.mubr.bf16.gmra.mrb[0].mxu0 %v346
    %v382 = vpop.f32.mrb[0].mxu0
    %v383 = vadd.f32 0.0, %v382
    %v384 = vpop.f32.mrb[0].mxu0
    %v385 = vadd.f32 0.0, %v384
    %v386 = vpop.f32.mrb[0].mxu0
    %v387 = vpop.f32.mrb[0].mxu0
    %388 = vdwg.mxu0
    %v389 = vsel %vm184, %v383, %v385
    %v390 = vadd.f32 %v389, %v199
    %v391 = vxor.u32 %v390, 2147483648
    %v392 = vmul.f32 %v391, 1.442695
    %v393 = vpow.pop %v392
    %v394 = vadd.f32 %v393, 1.0
    %v395 = vrcp.pop %v394
    %v396 = vmul.f32 1.0, %v395
    %v397 = vtanh.pop %v390
    %v398 = vmul.f32 %v396, %v332
    %400 = vrot.lane.b32.xlu0 %v397, 64
    %v401 = vpop.permute.xlu0 %400
    %v403 = vmul.f32 %v396, %v401
    %405 = vrot.lane.b32.xlu0 %v403, 32
    %v406 = vpop.permute.xlu0 %405
    %v408 = vadd.f32 %v398, %v406
    %v409 = vtanh.pop %v408
    %411 = vrot.lane.b32.xlu0 %v409, 64
    %v412 = vpop.permute.xlu0 %411
    %v414 = vmul.f32 %v396, %v412
    %416 = vrot.lane.b32.xlu0 %v414, 32
    %v417 = vpop.permute.xlu0 %416
    %vm419 = vcmask 261124
    %420 = vst.msk [vmem:[#allocation3 - $0x4] sm:$0xf0] %vm419, %v417
    %v421 = vld [vmem:[#allocation2 + $0x8] sm:$0xf]
    %v422 = vrot.slane %v414, 4
    %423 = vrot.lane.b32.xlu0 %v422, 32
    %v424 = vpop.permute.xlu0 %423
    %v426 = vsel %vm206, %v421, %v424
    %427 = vrot.lane.b32.xlu0 %v414, 64
    %v428 = vpop.permute.xlu0 %427
    %v430 = vsel %vm169, %v426, %v428
    %v431 = vpack.c.bf16 %v430, %v430
    %v433 = vsel %vm253, %v431, 0
    %435 = vmatprep.subr.bf16.mxu0 %v238
    %436 = vmatpush1.bf16.msra.mxu0 %v237
    %437 = vmatprep.subr.bf16.mxu0 %v240
    %438 = vmatpush1.bf16.msra.mxu0 %v239
    %439 = vmatprep.subr.bf16.mxu0 %v242
    %440 = vmatpush1.bf16.msra.mxu0 %v241
    %441 = vmatprep.subr.bf16.mxu0 %v244
    %442 = vmatpush1.bf16.msra.mxu0 %v243
    %443 = vmatprep.subr.bf16.mxu0 0
    %444 = vmatpush1.bf16.msra.mxu0 0
    %445 = vmatprep.subr.bf16.mxu0 0
    %446 = vmatpush1.bf16.msra.mxu0 0
    %447 = vmatprep.subr.bf16.mxu0 0
    %448 = vmatpush1.bf16.msra.mxu0 0
    %449 = vmatprep.subr.bf16.mxu0 0
    %450 = vmatpush1.bf16.msra.mxu0 0
    %451 = vmatprep.subr.bf16.mxu0 0
    %452 = vmatpush1.bf16.msra.mxu0 0
    %453 = vmatprep.subr.bf16.mxu0 0
    %454 = vmatpush1.bf16.msra.mxu0 0
    %455 = vmatprep.subr.bf16.mxu0 0
    %456 = vmatpush1.bf16.msra.mxu0 0
    %457 = vmatprep.subr.bf16.mxu0 0
    %458 = vmatpush1.bf16.msra.mxu0 0
    %459 = vmatprep.subr.bf16.mxu0 0
    %460 = vmatpush1.bf16.msra.mxu0 0
    %461 = vmatprep.subr.bf16.mxu0 0
    %462 = vmatpush1.bf16.msra.mxu0 0
    %463 = vmatprep.subr.bf16.mxu0 0
    %464 = vmatpush1.bf16.msra.mxu0 0
    %465 = vmatprep.subr.bf16.mxu0 0
    %466 = vmatpush1.bf16.msra.mxu0 0
    %467 = vmatprep.mubr.bf16.mxu0 0
    %468 = vmatmul.mubr.bf16.gmra.mrb[0].mxu0 %v433
    %v469 = vpop.f32.mrb[0].mxu0
    %v470 = vadd.f32 0.0, %v469
    %v471 = vpop.f32.mrb[0].mxu0
    %v472 = vadd.f32 0.0, %v471
    %v473 = vpop.f32.mrb[0].mxu0
    %v474 = vpop.f32.mrb[0].mxu0
    %475 = vdwg.mxu0
    %v476 = vsel %vm184, %v470, %v472
    %v477 = vadd.f32 %v476, %v199
    %v478 = vxor.u32 %v477, 2147483648
    %v479 = vmul.f32 %v478, 1.442695
    %v480 = vpow.pop %v479
    %v481 = vadd.f32 %v480, 1.0
    %v482 = vrcp.pop %v481
    %v483 = vmul.f32 1.0, %v482
    %v484 = vtanh.pop %v477
    %v485 = vmul.f32 %v483, %v408
    %487 = vrot.lane.b32.xlu0 %v484, 64
    %v488 = vpop.permute.xlu0 %487
    %v490 = vmul.f32 %v483, %v488
    %492 = vrot.lane.b32.xlu0 %v490, 32
    %v493 = vpop.permute.xlu0 %492
    %v495 = vadd.f32 %v485, %v493
    %v496 = vtanh.pop %v495
    %498 = vrot.lane.b32.xlu0 %v496, 64
    %v499 = vpop.permute.xlu0 %498
    %v501 = vmul.f32 %v483, %v499
    %503 = vrot.lane.b32.xlu0 %v501, 32
    %v504 = vpop.permute.xlu0 %503
    %506 = vst.msk [vmem:[#allocation3] sm:$0xf0] %vm419, %v504
    %v507 = vld [vmem:[#allocation2 + $0xc] sm:$0xf]
    %v508 = vrot.slane %v501, 4
    %509 = vrot.lane.b32.xlu0 %v508, 32
    %v510 = vpop.permute.xlu0 %509
    %v512 = vsel %vm206, %v507, %v510
    %513 = vrot.lane.b32.xlu0 %v501, 64
    %v514 = vpop.permute.xlu0 %513
    %v516 = vsel %vm169, %v512, %v514
    %v517 = vpack.c.bf16 %v516, %v516
    %v519 = vsel %vm253, %v517, 0
    %521 = vmatprep.subr.bf16.mxu0 %v238
    %522 = vmatpush1.bf16.msra.mxu0 %v237
    %523 = vmatprep.subr.bf16.mxu0 %v240
    %524 = vmatpush1.bf16.msra.mxu0 %v239
    %525 = vmatprep.subr.bf16.mxu0 %v242
    %526 = vmatpush1.bf16.msra.mxu0 %v241
    %527 = vmatprep.subr.bf16.mxu0 %v244
    %528 = vmatpush1.bf16.msra.mxu0 %v243
    %529 = vmatprep.subr.bf16.mxu0 0
    %530 = vmatpush1.bf16.msra.mxu0 0
    %531 = vmatprep.subr.bf16.mxu0 0
    %532 = vmatpush1.bf16.msra.mxu0 0
    %533 = vmatprep.subr.bf16.mxu0 0
    %534 = vmatpush1.bf16.msra.mxu0 0
    %535 = vmatprep.subr.bf16.mxu0 0
    %536 = vmatpush1.bf16.msra.mxu0 0
    %537 = vmatprep.subr.bf16.mxu0 0
    %538 = vmatpush1.bf16.msra.mxu0 0
    %539 = vmatprep.subr.bf16.mxu0 0
    %540 = vmatpush1.bf16.msra.mxu0 0
    %541 = vmatprep.subr.bf16.mxu0 0
    %542 = vmatpush1.bf16.msra.mxu0 0
    %543 = vmatprep.subr.bf16.mxu0 0
    %544 = vmatpush1.bf16.msra.mxu0 0
    %545 = vmatprep.subr.bf16.mxu0 0
    %546 = vmatpush1.bf16.msra.mxu0 0
    %547 = vmatprep.subr.bf16.mxu0 0
    %548 = vmatpush1.bf16.msra.mxu0 0
    %549 = vmatprep.subr.bf16.mxu0 0
    %550 = vmatpush1.bf16.msra.mxu0 0
    %551 = vmatprep.subr.bf16.mxu0 0
    %552 = vmatpush1.bf16.msra.mxu0 0
    %553 = vmatprep.mubr.bf16.mxu0 0
    %554 = vmatmul.mubr.bf16.gmra.mrb[0].mxu0 %v519
    %v555 = vpop.f32.mrb[0].mxu0
    %v556 = vadd.f32 0.0, %v555
    %v557 = vpop.f32.mrb[0].mxu0
    %v558 = vadd.f32 0.0, %v557
    %v559 = vpop.f32.mrb[0].mxu0
    %v560 = vpop.f32.mrb[0].mxu0
    %561 = vdwg.mxu0
    %v562 = vsel %vm184, %v556, %v558
    %v563 = vadd.f32 %v562, %v199
    %v564 = vxor.u32 %v563, 2147483648
    %v565 = vmul.f32 %v564, 1.442695
    %v566 = vpow.pop %v565
    %v567 = vadd.f32 %v566, 1.0
    %v568 = vrcp.pop %v567
    %v569 = vmul.f32 1.0, %v568
    %v570 = vtanh.pop %v563
    %v571 = vmul.f32 %v569, %v495
    %573 = vrot.lane.b32.xlu0 %v570, 64
    %v574 = vpop.permute.xlu0 %573
    %v576 = vmul.f32 %v569, %v574
    %578 = vrot.lane.b32.xlu0 %v576, 32
    %v579 = vpop.permute.xlu0 %578
    %v581 = vadd.f32 %v571, %v579
    %v582 = vtanh.pop %v581
    %584 = vrot.lane.b32.xlu0 %v582, 64
    %v585 = vpop.permute.xlu0 %584
    %v587 = vmul.f32 %v569, %v585
    %589 = vrot.lane.b32.xlu0 %v587, 32
    %v590 = vpop.permute.xlu0 %589
    %592 = vst.msk [vmem:[#allocation3 + $0x4] sm:$0xf0] %vm419, %v590
    %v593 = vld [vmem:[#allocation2 + $0x10] sm:$0xf]
    %v594 = vrot.slane %v587, 4
    %595 = vrot.lane.b32.xlu0 %v594, 32
    %v596 = vpop.permute.xlu0 %595
    %v598 = vsel %vm206, %v593, %v596
    %599 = vrot.lane.b32.xlu0 %v587, 64
    %v600 = vpop.permute.xlu0 %599
    %v602 = vsel %vm169, %v598, %v600
    %v603 = vpack.c.bf16 %v602, %v602
    %v605 = vsel %vm253, %v603, 0
    %607 = vmatprep.subr.bf16.mxu0 %v238
    %608 = vmatpush1.bf16.msra.mxu0 %v237
    %609 = vmatprep.subr.bf16.mxu0 %v240
    %610 = vmatpush1.bf16.msra.mxu0 %v239
    %611 = vmatprep.subr.bf16.mxu0 %v242
    %612 = vmatpush1.bf16.msra.mxu0 %v241
    %613 = vmatprep.subr.bf16.mxu0 %v244
    %614 = vmatpush1.bf16.msra.mxu0 %v243
    %615 = vmatprep.subr.bf16.mxu0 0
    %616 = vmatpush1.bf16.msra.mxu0 0
    %617 = vmatprep.subr.bf16.mxu0 0
    %618 = vmatpush1.bf16.msra.mxu0 0
    %619 = vmatprep.subr.bf16.mxu0 0
    %620 = vmatpush1.bf16.msra.mxu0 0
    %621 = vmatprep.subr.bf16.mxu0 0
    %622 = vmatpush1.bf16.msra.mxu0 0
    %623 = vmatprep.subr.bf16.mxu0 0
    %624 = vmatpush1.bf16.msra.mxu0 0
    %625 = vmatprep.subr.bf16.mxu0 0
    %626 = vmatpush1.bf16.msra.mxu0 0
    %627 = vmatprep.subr.bf16.mxu0 0
    %628 = vmatpush1.bf16.msra.mxu0 0
    %629 = vmatprep.subr.bf16.mxu0 0
    %630 = vmatpush1.bf16.msra.mxu0 0
    %631 = vmatprep.subr.bf16.mxu0 0
    %632 = vmatpush1.bf16.msra.mxu0 0
    %633 = vmatprep.subr.bf16.mxu0 0
    %634 = vmatpush1.bf16.msra.mxu0 0
    %635 = vmatprep.subr.bf16.mxu0 0
    %636 = vmatpush1.bf16.msra.mxu0 0
    %637 = vmatprep.subr.bf16.mxu0 0
    %638 = vmatpush1.bf16.msra.mxu0 0
    %639 = vmatprep.mubr.bf16.mxu0 0
    %640 = vmatmul.mubr.bf16.gmra.mrb[0].mxu0 %v605
    %v641 = vpop.f32.mrb[0].mxu0
    %v642 = vadd.f32 0.0, %v641
    %v643 = vpop.f32.mrb[0].mxu0
    %v644 = vadd.f32 0.0, %v643
    %v645 = vpop.f32.mrb[0].mxu0
    %v646 = vpop.f32.mrb[0].mxu0
    %647 = vdwg.mxu0
    %v648 = vsel %vm184, %v642, %v644
    %v649 = vadd.f32 %v648, %v199
    %v650 = vxor.u32 %v649, 2147483648
    %v651 = vmul.f32 %v650, 1.442695
    %v652 = vpow.pop %v651
    %v653 = vadd.f32 %v652, 1.0
    %v654 = vrcp.pop %v653
    %v655 = vmul.f32 1.0, %v654
    %v656 = vtanh.pop %v649
    %v657 = vmul.f32 %v655, %v581
    %659 = vrot.lane.b32.xlu0 %v656, 64
    %v660 = vpop.permute.xlu0 %659
    %v662 = vmul.f32 %v655, %v660
    %664 = vrot.lane.b32.xlu0 %v662, 32
    %v665 = vpop.permute.xlu0 %664
    %v667 = vadd.f32 %v657, %v665
    %v668 = vtanh.pop %v667
    %670 = vrot.lane.b32.xlu0 %v668, 64
    %v671 = vpop.permute.xlu0 %670
    %v673 = vmul.f32 %v655, %v671
    %675 = vrot.lane.b32.xlu0 %v673, 32
    %v676 = vpop.permute.xlu0 %675
    %678 = vst.msk [vmem:[#allocation3 + $0x8] sm:$0xf0] %vm419, %v676
    %v679 = vld [vmem:[#allocation2 + $0x14] sm:$0xf]
    %v680 = vrot.slane %v673, 4
    %681 = vrot.lane.b32.xlu0 %v680, 32
    %v682 = vpop.permute.xlu0 %681
    %v684 = vsel %vm206, %v679, %v682
    %685 = vrot.lane.b32.xlu0 %v673, 64
    %v686 = vpop.permute.xlu0 %685
    %v688 = vsel %vm169, %v684, %v686
    %v689 = vpack.c.bf16 %v688, %v688
    %v691 = vsel %vm253, %v689, 0
    %693 = vmatprep.subr.bf16.mxu0 %v238
    %694 = vmatpush1.bf16.msra.mxu0 %v237
    %695 = vmatprep.subr.bf16.mxu0 %v240
    %696 = vmatpush1.bf16.msra.mxu0 %v239
    %697 = vmatprep.subr.bf16.mxu0 %v242
    %698 = vmatpush1.bf16.msra.mxu0 %v241
    %699 = vmatprep.subr.bf16.mxu0 %v244
    %700 = vmatpush1.bf16.msra.mxu0 %v243
    %701 = vmatprep.subr.bf16.mxu0 0
    %702 = vmatpush1.bf16.msra.mxu0 0
    %703 = vmatprep.subr.bf16.mxu0 0
    %704 = vmatpush1.bf16.msra.mxu0 0
    %705 = vmatprep.subr.bf16.mxu0 0
    %706 = vmatpush1.bf16.msra.mxu0 0
    %707 = vmatprep.subr.bf16.mxu0 0
    %708 = vmatpush1.bf16.msra.mxu0 0
    %709 = vmatprep.subr.bf16.mxu0 0
    %710 = vmatpush1.bf16.msra.mxu0 0
    %711 = vmatprep.subr.bf16.mxu0 0
    %712 = vmatpush1.bf16.msra.mxu0 0
    %713 = vmatprep.subr.bf16.mxu0 0
    %714 = vmatpush1.bf16.msra.mxu0 0
    %715 = vmatprep.subr.bf16.mxu0 0
    %716 = vmatpush1.bf16.msra.mxu0 0
    %717 = vmatprep.subr.bf16.mxu0 0
    %718 = vmatpush1.bf16.msra.mxu0 0
    %719 = vmatprep.subr.bf16.mxu0 0
    %720 = vmatpush1.bf16.msra.mxu0 0
    %721 = vmatprep.subr.bf16.mxu0 0
    %722 = vmatpush1.bf16.msra.mxu0 0
    %723 = vmatprep.subr.bf16.mxu0 0
    %724 = vmatpush1.bf16.msra.mxu0 0
    %725 = vmatprep.mubr.bf16.mxu0 0
    %726 = vmatmul.mubr.bf16.gmra.mrb[0].mxu0 %v691
    %v727 = vpop.f32.mrb[0].mxu0
    %v728 = vadd.f32 0.0, %v727
    %v729 = vpop.f32.mrb[0].mxu0
    %v730 = vadd.f32 0.0, %v729
    %v731 = vpop.f32.mrb[0].mxu0
    %v732 = vpop.f32.mrb[0].mxu0
    %733 = vdwg.mxu0
    %v734 = vsel %vm184, %v728, %v730
    %v735 = vadd.f32 %v734, %v199
    %v736 = vxor.u32 %v735, 2147483648
    %v737 = vmul.f32 %v736, 1.442695
    %v738 = vpow.pop %v737
    %v739 = vadd.f32 %v738, 1.0
    %v740 = vrcp.pop %v739
    %v741 = vmul.f32 1.0, %v740
    %v742 = vtanh.pop %v735
    %v743 = vmul.f32 %v741, %v667
    %745 = vrot.lane.b32.xlu0 %v742, 64
    %v746 = vpop.permute.xlu0 %745
    %v748 = vmul.f32 %v741, %v746
    %750 = vrot.lane.b32.xlu0 %v748, 32
    %v751 = vpop.permute.xlu0 %750
    %v753 = vadd.f32 %v743, %v751
    %v754 = vtanh.pop %v753
    %756 = vrot.lane.b32.xlu0 %v754, 64
    %v757 = vpop.permute.xlu0 %756
    %v759 = vmul.f32 %v741, %v757
    %761 = vrot.lane.b32.xlu0 %v759, 32
    %v762 = vpop.permute.xlu0 %761
    %764 = vst.msk [vmem:[#allocation3 + $0xc] sm:$0xf0] %vm419, %v762
    %v765 = vld [vmem:[#allocation2 + $0x18] sm:$0xf]
    %v766 = vrot.slane %v759, 4
    %767 = vrot.lane.b32.xlu0 %v766, 32
    %v768 = vpop.permute.xlu0 %767
    %v770 = vsel %vm206, %v765, %v768
    %771 = vrot.lane.b32.xlu0 %v759, 64
    %v772 = vpop.permute.xlu0 %771
    %v774 = vsel %vm169, %v770, %v772
    %v775 = vpack.c.bf16 %v774, %v774
    %v777 = vsel %vm253, %v775, 0
    %779 = vmatprep.subr.bf16.mxu0 %v238
    %780 = vmatpush1.bf16.msra.mxu0 %v237
    %781 = vmatprep.subr.bf16.mxu0 %v240
    %782 = vmatpush1.bf16.msra.mxu0 %v239
    %783 = vmatprep.subr.bf16.mxu0 %v242
    %784 = vmatpush1.bf16.msra.mxu0 %v241
    %785 = vmatprep.subr.bf16.mxu0 %v244
    %786 = vmatpush1.bf16.msra.mxu0 %v243
    %787 = vmatprep.subr.bf16.mxu0 0
    %788 = vmatpush1.bf16.msra.mxu0 0
    %789 = vmatprep.subr.bf16.mxu0 0
    %790 = vmatpush1.bf16.msra.mxu0 0
    %791 = vmatprep.subr.bf16.mxu0 0
    %792 = vmatpush1.bf16.msra.mxu0 0
    %793 = vmatprep.subr.bf16.mxu0 0
    %794 = vmatpush1.bf16.msra.mxu0 0
    %795 = vmatprep.subr.bf16.mxu0 0
    %796 = vmatpush1.bf16.msra.mxu0 0
    %797 = vmatprep.subr.bf16.mxu0 0
    %798 = vmatpush1.bf16.msra.mxu0 0
    %799 = vmatprep.subr.bf16.mxu0 0
    %800 = vmatpush1.bf16.msra.mxu0 0
    %801 = vmatprep.subr.bf16.mxu0 0
    %802 = vmatpush1.bf16.msra.mxu0 0
    %803 = vmatprep.subr.bf16.mxu0 0
    %804 = vmatpush1.bf16.msra.mxu0 0
    %805 = vmatprep.subr.bf16.mxu0 0
    %806 = vmatpush1.bf16.msra.mxu0 0
    %807 = vmatprep.subr.bf16.mxu0 0
    %808 = vmatpush1.bf16.msra.mxu0 0
    %809 = vmatprep.subr.bf16.mxu0 0
    %810 = vmatpush1.bf16.msra.mxu0 0
    %811 = vmatprep.mubr.bf16.mxu0 0
    %812 = vmatmul.mubr.bf16.gmra.mrb[0].mxu0 %v777
    %v813 = vpop.f32.mrb[0].mxu0
    %v814 = vadd.f32 0.0, %v813
    %v815 = vpop.f32.mrb[0].mxu0
    %v816 = vadd.f32 0.0, %v815
    %v817 = vpop.f32.mrb[0].mxu0
    %v818 = vpop.f32.mrb[0].mxu0
    %819 = vdwg.mxu0
    %v820 = vsel %vm184, %v814, %v816
    %v821 = vadd.f32 %v820, %v199
    %v822 = vxor.u32 %v821, 2147483648
    %v823 = vmul.f32 %v822, 1.442695
    %v824 = vpow.pop %v823
    %v825 = vadd.f32 %v824, 1.0
    %v826 = vrcp.pop %v825
    %v827 = vmul.f32 1.0, %v826
    %v828 = vtanh.pop %v821
    %v829 = vmul.f32 %v827, %v753
    %831 = vrot.lane.b32.xlu0 %v828, 64
    %v832 = vpop.permute.xlu0 %831
    %v834 = vmul.f32 %v827, %v832
    %836 = vrot.lane.b32.xlu0 %v834, 32
    %v837 = vpop.permute.xlu0 %836
    %v839 = vadd.f32 %v829, %v837
    %v840 = vtanh.pop %v839
    %842 = vrot.lane.b32.xlu0 %v840, 64
    %v843 = vpop.permute.xlu0 %842
    %v845 = vmul.f32 %v827, %v843
    %847 = vrot.lane.b32.xlu0 %v845, 32
    %v848 = vpop.permute.xlu0 %847
    %850 = vst.msk [vmem:[#allocation3 + $0x10] sm:$0xf0] %vm419, %v848
    %v851 = vld [vmem:[#allocation2 + $0x1c] sm:$0xf]
    %v852 = vrot.slane %v845, 4
    %853 = vrot.lane.b32.xlu0 %v852, 32
    %v854 = vpop.permute.xlu0 %853
    %v856 = vsel %vm206, %v851, %v854
    %857 = vrot.lane.b32.xlu0 %v845, 64
    %v858 = vpop.permute.xlu0 %857
    %v860 = vsel %vm169, %v856, %v858
    %v861 = vpack.c.bf16 %v860, %v860
    %v863 = vsel %vm253, %v861, 0
    %865 = vmatprep.subr.bf16.mxu0 %v238
    %866 = vmatpush1.bf16.msra.mxu0 %v237
    %867 = vmatprep.subr.bf16.mxu0 %v240
    %868 = vmatpush1.bf16.msra.mxu0 %v239
    %869 = vmatprep.subr.bf16.mxu0 %v242
    %870 = vmatpush1.bf16.msra.mxu0 %v241
    %871 = vmatprep.subr.bf16.mxu0 %v244
    %872 = vmatpush1.bf16.msra.mxu0 %v243
    %873 = vmatprep.subr.bf16.mxu0 0
    %874 = vmatpush1.bf16.msra.mxu0 0
    %875 = vmatprep.subr.bf16.mxu0 0
    %876 = vmatpush1.bf16.msra.mxu0 0
    %877 = vmatprep.subr.bf16.mxu0 0
    %878 = vmatpush1.bf16.msra.mxu0 0
    %879 = vmatprep.subr.bf16.mxu0 0
    %880 = vmatpush1.bf16.msra.mxu0 0
    %881 = vmatprep.subr.bf16.mxu0 0
    %882 = vmatpush1.bf16.msra.mxu0 0
    %883 = vmatprep.subr.bf16.mxu0 0
    %884 = vmatpush1.bf16.msra.mxu0 0
    %885 = vmatprep.subr.bf16.mxu0 0
    %886 = vmatpush1.bf16.msra.mxu0 0
    %887 = vmatprep.subr.bf16.mxu0 0
    %888 = vmatpush1.bf16.msra.mxu0 0
    %889 = vmatprep.subr.bf16.mxu0 0
    %890 = vmatpush1.bf16.msra.mxu0 0
    %891 = vmatprep.subr.bf16.mxu0 0
    %892 = vmatpush1.bf16.msra.mxu0 0
    %893 = vmatprep.subr.bf16.mxu0 0
    %894 = vmatpush1.bf16.msra.mxu0 0
    %895 = vmatprep.subr.bf16.mxu0 0
    %896 = vmatpush1.bf16.msra.mxu0 0
    %897 = vmatprep.mubr.bf16.mxu0 0
    %898 = vmatmul.mubr.bf16.gmra.mrb[0].mxu0 %v863
    %v899 = vpop.f32.mrb[0].mxu0
    %v900 = vadd.f32 0.0, %v899
    %v901 = vpop.f32.mrb[0].mxu0
    %v902 = vadd.f32 0.0, %v901
    %v903 = vpop.f32.mrb[0].mxu0
    %v904 = vpop.f32.mrb[0].mxu0
    %905 = vdwg.mxu0
    %v906 = vsel %vm184, %v900, %v902
    %v907 = vadd.f32 %v906, %v199
    %v908 = vxor.u32 %v907, 2147483648
    %v909 = vmul.f32 %v908, 1.442695
    %v910 = vpow.pop %v909
    %v911 = vadd.f32 %v910, 1.0
    %v912 = vrcp.pop %v911
    %v913 = vmul.f32 1.0, %v912
    %v914 = vtanh.pop %v907
    %v915 = vmul.f32 %v913, %v839
    %917 = vrot.lane.b32.xlu0 %v914, 64
    %v918 = vpop.permute.xlu0 %917
    %v920 = vmul.f32 %v913, %v918
    %922 = vrot.lane.b32.xlu0 %v920, 32
    %v923 = vpop.permute.xlu0 %922
    %v925 = vadd.f32 %v915, %v923
    %v926 = vtanh.pop %v925
    %928 = vrot.lane.b32.xlu0 %v926, 64
    %v929 = vpop.permute.xlu0 %928
    %v931 = vmul.f32 %v913, %v929
    %933 = vrot.lane.b32.xlu0 %v931, 32
    %v934 = vpop.permute.xlu0 %933
    %936 = vst.msk [vmem:[#allocation3 + $0x14] sm:$0xf0] %vm419, %v934
    %v937 = vrot.slane %v931, 4
    %938 = vrot.lane.b32.xlu0 %v937, 32
    %v939 = vpop.permute.xlu0 %938
    %v941 = vsel %vm206, 0.0, %v939
    %942 = vrot.lane.b32.xlu0 %v931, 64
    %v943 = vpop.permute.xlu0 %942
    %v945 = vsel %vm169, %v941, %v943
    %v946 = vpack.c.bf16 %v945, %v945
    %v948 = vsel %vm253, %v946, 0
    %950 = vmatprep.subr.bf16.mxu0 %v238
    %951 = vmatpush1.bf16.msra.mxu0 %v237
    %952 = vmatprep.subr.bf16.mxu0 %v240
    %953 = vmatpush1.bf16.msra.mxu0 %v239
    %954 = vmatprep.subr.bf16.mxu0 %v242
    %955 = vmatpush1.bf16.msra.mxu0 %v241
    %956 = vmatprep.subr.bf16.mxu0 %v244
    %957 = vmatpush1.bf16.msra.mxu0 %v243
    %958 = vmatprep.subr.bf16.mxu0 0
    %959 = vmatpush1.bf16.msra.mxu0 0
    %960 = vmatprep.subr.bf16.mxu0 0
    %961 = vmatpush1.bf16.msra.mxu0 0
    %962 = vmatprep.subr.bf16.mxu0 0
    %963 = vmatpush1.bf16.msra.mxu0 0
    %964 = vmatprep.subr.bf16.mxu0 0
    %965 = vmatpush1.bf16.msra.mxu0 0
    %966 = vmatprep.subr.bf16.mxu0 0
    %967 = vmatpush1.bf16.msra.mxu0 0
    %968 = vmatprep.subr.bf16.mxu0 0
    %969 = vmatpush1.bf16.msra.mxu0 0
    %970 = vmatprep.subr.bf16.mxu0 0
    %971 = vmatpush1.bf16.msra.mxu0 0
    %972 = vmatprep.subr.bf16.mxu0 0
    %973 = vmatpush1.bf16.msra.mxu0 0
    %974 = vmatprep.subr.bf16.mxu0 0
    %975 = vmatpush1.bf16.msra.mxu0 0
    %976 = vmatprep.subr.bf16.mxu0 0
    %977 = vmatpush1.bf16.msra.mxu0 0
    %978 = vmatprep.subr.bf16.mxu0 0
    %979 = vmatpush1.bf16.msra.mxu0 0
    %980 = vmatprep.subr.bf16.mxu0 0
    %981 = vmatpush1.bf16.msra.mxu0 0
    %982 = vmatprep.mubr.bf16.mxu0 0
    %983 = vmatmul.mubr.bf16.gmra.mrb[0].mxu0 %v948
    %v984 = vpop.f32.mrb[0].mxu0
    %v985 = vadd.f32 0.0, %v984
    %v986 = vpop.f32.mrb[0].mxu0
    %v987 = vadd.f32 0.0, %v986
    %v988 = vpop.f32.mrb[0].mxu0
    %v989 = vpop.f32.mrb[0].mxu0
    %990 = vdwg.mxu0
    %v991 = vsel %vm184, %v985, %v987
    %v992 = vadd.f32 %v991, %v199
    %v993 = vxor.u32 %v992, 2147483648
    %v994 = vmul.f32 %v993, 1.442695
    %v995 = vpow.pop %v994
    %v996 = vadd.f32 %v995, 1.0
    %v997 = vrcp.pop %v996
    %v998 = vmul.f32 1.0, %v997
    %v999 = vtanh.pop %v992
    %v1000 = vmul.f32 %v998, %v925
    %1002 = vrot.lane.b32.xlu0 %v999, 64
    %v1003 = vpop.permute.xlu0 %1002
    %v1005 = vmul.f32 %v998, %v1003
    %1007 = vrot.lane.b32.xlu0 %v1005, 32
    %v1008 = vpop.permute.xlu0 %1007
    %v1010 = vadd.f32 %v1000, %v1008
    %v1011 = vtanh.pop %v1010
    %1013 = vrot.lane.b32.xlu0 %v1011, 64
    %v1014 = vpop.permute.xlu0 %1013
    %v1016 = vmul.f32 %v998, %v1014
    %v1017 = vsel %vm184, %v931, %v1016
    %v1018 = vsel %vm184, %v925, %v1010
    %1020 = vrot.lane.b32.xlu0 %v1017, 32
    %v1021 = vpop.permute.xlu0 %1020
    %1023 = vst.msk [vmem:[#allocation3 + $0x18] sm:$0xf0] %vm419, %v1021
    %1024 = vst.msk [vmem:[#allocation6] sm:$0xff] %vm169, %v1021
    %1026 = vrot.lane.b32.xlu0 %v1018, 96
    %v1027 = vpop.permute.xlu0 %1026
    %1029 = vst.msk [vmem:[#allocation8] sm:$0xff] %vm169, %v1027
    %v1030 = vld [vmem:[#allocation3] sm:$0xff]
    %v1031 = vld [vmem:[#allocation3 + $0x8] sm:$0xff]
    %v1032 = vld [vmem:[#allocation3 + $0x10] sm:$0xff]
    %v1033 = vld [vmem:[#allocation3 + $0x18] sm:$0xff]
    %v1034 = vpack.c.bf16 %v1031, %v1030
    %v1035 = vpack.c.bf16 %v1033, %v1032
    %v1036 = vld [vmem:[%s7] sm:$0xf]
    %v1037 = vld [vmem:[%s7 + $0x4] sm:$0xf]
    %v1038 = vld [vmem:[%s7 + $0x8] sm:$0xf]
    %v1039 = vld [vmem:[%s7 + $0xc] sm:$0xf]
    %v1040 = vld [vmem:[%s8] sm:$0x1]
    %v1042 = vlaneseq
    %v1043 = vshrl.u32 %v1042, 7
    %v1044 = vsub.s32 0, %v1043
    %v1045 = vrot.slane %v1040, %v1044
    %v1051 = vunpack.c.l.b16 %v1036
    %v1052 = vunpack.c.l.b16 %v1037
    %v1053 = vunpack.c.l.b16 %v1038
    %v1054 = vunpack.c.l.b16 %v1039
    %v1055 = vpack.c.b16 %v1052, %v1051
    %v1056 = vpack.c.b16 %v1054, %v1053
    %v1060 = vsel %vm169, %v1034, 0
    %v1063 = vsel %vm169, %v1035, 0
    %1065 = vmatprep.subr.bf16.mxu0 0
    %1066 = vmatpush1.bf16.msra.mxu0 %v1055
    %1067 = vmatprep.subr.bf16.mxu0 0
    %1068 = vmatpush1.bf16.msra.mxu0 %v1056
    %1069 = vmatprep.subr.bf16.mxu0 0
    %1070 = vmatpush1.bf16.msra.mxu0 0
    %1071 = vmatprep.subr.bf16.mxu0 0
    %1072 = vmatpush1.bf16.msra.mxu0 0
    %1073 = vmatprep.subr.bf16.mxu0 0
    %1074 = vmatpush1.bf16.msra.mxu0 0
    %1075 = vmatprep.subr.bf16.mxu0 0
    %1076 = vmatpush1.bf16.msra.mxu0 0
    %1077 = vmatprep.subr.bf16.mxu0 0
    %1078 = vmatpush1.bf16.msra.mxu0 0
    %1079 = vmatprep.subr.bf16.mxu0 0
    %1080 = vmatpush1.bf16.msra.mxu0 0
    %1081 = vmatprep.subr.bf16.mxu0 0
    %1082 = vmatpush1.bf16.msra.mxu0 0
    %1083 = vmatprep.subr.bf16.mxu0 0
    %1084 = vmatpush1.bf16.msra.mxu0 0
    %1085 = vmatprep.subr.bf16.mxu0 0
    %1086 = vmatpush1.bf16.msra.mxu0 0
    %1087 = vmatprep.subr.bf16.mxu0 0
    %1088 = vmatpush1.bf16.msra.mxu0 0
    %1089 = vmatprep.subr.bf16.mxu0 0
    %1090 = vmatpush1.bf16.msra.mxu0 0
    %1091 = vmatprep.subr.bf16.mxu0 0
    %1092 = vmatpush1.bf16.msra.mxu0 0
    %1093 = vmatprep.subr.bf16.mxu0 0
    %1094 = vmatpush1.bf16.msra.mxu0 0
    %1095 = vmatprep.subr.bf16.mxu0 0
    %1096 = vmatpush1.bf16.msra.mxu0 0
    %1097 = vmatprep.mubr.bf16.mxu0 0
    %1098 = vmatmul.mubr.bf16.gmra.mrb[0].mxu0 %v1060
    %v1099 = vpop.f32.mrb[0].mxu0
    %v1100 = vadd.f32 %v1045, %v1099
    %v1101 = vpop.f32.mrb[0].mxu0
    %v1102 = vpop.f32.mrb[0].mxu0
    %v1103 = vadd.f32 %v1045, %v1102
    %v1104 = vpop.f32.mrb[0].mxu0
    %1105 = vmatprep.mubr.bf16.mxu0 0
    %1106 = vmatmul.mubr.bf16.gmra.mrb[0].mxu0 %v1063
    %v1107 = vpop.f32.mrb[0].mxu0
    %v1108 = vadd.f32 %v1045, %v1107
    %v1109 = vpop.f32.mrb[0].mxu0
    %v1110 = vpop.f32.mrb[0].mxu0
    %v1111 = vadd.f32 %v1045, %v1110
    %v1112 = vpop.f32.mrb[0].mxu0
    %1113 = vdwg.mxu0
    %1114 = vst [vmem:[#allocation4] sm:$0xff] %v1100
    %1115 = vst [vmem:[#allocation4 + $0x8] sm:$0xff] %v1103
    %1116 = vst [vmem:[#allocation4 + $0x10] sm:$0xff] %v1108
    %1117 = vst [vmem:[#allocation4 + $0x18] sm:$0xff] %v1111
    // Predicated region
    $region38: #{forward.1} parent=1 // pred_check
      _
    $region39: #{forward.1} parent=1 // pred_check_branch
      %1119 = sbr.rel (0) target = $region41
    $region40: #{forward.1} parent=1 // pred_region
      %s1121 = ssub.s32 512, 512
      %1122 = vsyncadd [#allocation5], %s1121
      %s1123 = sshll.u32 [#allocation4], 4
      %s1124 = int_to_ptr.vmem [resolvable:$true] %s1123
      %1129 = dma.vmem_to_hbm [thread:$0]  %s1124, 512, %s9, [#allocation5], 128, 128, 8
    $region41: #{forward.1} parent=1 // pred_fallthru
      _
    // Predicated region
    $region42: #{forward.1} parent=1 // pred_check
      _
    $region43: #{forward.1} parent=1 // pred_check_branch
      %1131 = sbr.rel (0) target = $region45
    $region44: #{forward.1} parent=1 // pred_region
      %s1133 = ssub.s32 128, 128
      %1134 = vsyncadd [#allocation7], %s1133
      %s1136 = sshll.u32 [#allocation6], 4
      %s1137 = int_to_ptr.vmem [resolvable:$true] %s1136
      %1139 = dma.vmem_to_hbm [thread:$0]  %s1137, 128, %s10, [#allocation7]
    $region45: #{forward.1} parent=1 // pred_fallthru
      _
    // Predicated region
    $region46: #{forward.1} parent=1 // pred_check
      _
    $region47: #{forward.1} parent=1 // pred_check_branch
      %1141 = sbr.rel (0) target = $region49
    $region48: #{forward.1} parent=1 // pred_region
      %s1143 = ssub.s32 128, 128
      %1144 = vsyncadd [#allocation7], %s1143
      %s1146 = sshll.u32 [#allocation8], 4
      %s1147 = int_to_ptr.vmem [resolvable:$true] %s1146
      %1149 = dma.vmem_to_hbm [thread:$0]  %s1147, 128, %s11, [#allocation7]
    $region49: #{forward.1} parent=1 // pred_fallthru
      _
    // Predicated region
    $region50: #{forward.1} parent=1 // pred_check
      _
    $region51: #{forward.1} parent=1 // pred_check_branch
      %1151 = sbr.rel (0) target = $region53
    $region52: #{forward.1} parent=1 // pred_region
      %1152 = dma.done [#allocation5], 512
    $region53: #{forward.1} parent=1 // pred_fallthru
      _
    // Predicated region
    $region54: #{forward.1} parent=1 // pred_check
      _
    $region55: #{forward.1} parent=1 // pred_check_branch
      %1154 = sbr.rel (0) target = $region57
    $region56: #{forward.1} parent=1 // pred_region
      %1155 = dma.done [#allocation7], 128
    $region57: #{forward.1} parent=1 // pred_fallthru
      _
    // Predicated region
    $region58: #{forward.1} parent=1 // pred_check
      _
    $region59: #{forward.1} parent=1 // pred_check_branch
      %1157 = sbr.rel (0) target = $region61
    $region60: #{forward.1} parent=1 // pred_region
      %1158 = dma.done [#allocation7], 128
    $region61: #{forward.1} parent=1 // pred_fallthru
      _
    %1159 = vsyncpa [#allocation5], 1
    %1160 = vsyncpa [#allocation7], 1

</llo_original>
